<compile_context>
chip_gen: v7x
topology: tpu7x:2x2x1
jax: 0.10.0
libtpu: 0.0.40
codegen_flags: <defaults>
</compile_context>

<pallas_src>
import functools

import numpy as np

import jax
import jax.numpy as jnp
from jax.experimental import pallas as pl
from jax.experimental.pallas import tpu as pltpu


# 3x3 tap offsets in (row, col) order; index t == flat index of a (3,3) kernel.
_TAPS = tuple((oy, ox) for oy in (-1, 0, 1) for ox in (-1, 0, 1))


def _round_up(x, m):
    return (x + m - 1) // m * m


def _tap_masks(H, W, L):
    """(9, L) f32 validity masks for a 3x3 conv (padding=1) on a row-flattened
    H*W image stored in the first H*W lanes of an L-lane row (tail lanes zero)."""
    m = np.zeros((9, L), np.float32)
    for t, (oy, ox) in enumerate(_TAPS):
        for h in range(H):
            for w in range(W):
                if 0 <= h + oy < H and 0 <= w + ox < W:
                    m[t, h * W + w] = 1.0
    return m


def _upsample_scatter(H1, W1, H2, W2, L1, L2):
    """(4, L1, L2) 0/1 matrices: phase (a,b) pixel (h,w) -> output pixel
    (pad_top + 2h + a, pad_left + 2w + b).  Encodes the ConvTranspose2d(k=2,s=2)
    de-interleave AND the F.pad placement (a negative diff == crop simply drops
    out-of-range positions, matching torch F.pad semantics)."""
    pad_top = (H2 - 2 * H1) // 2
    pad_left = (W2 - 2 * W1) // 2
    s = np.zeros((4, L1, L2), np.float32)
    for a in range(2):
        for b in range(2):
            for h in range(H1):
                for w in range(W1):
                    yy = pad_top + 2 * h + a
                    xx = pad_left + 2 * w + b
                    if 0 <= yy < H2 and 0 <= xx < W2:
                        s[a * 2 + b, h * W1 + w, yy * W2 + xx] = 1.0
    return s


# ----------------------------------------------------------------------------- #
# Fused kernel: Decoder + ConvTranspose2d(2,2) + F.pad + SeparableConv2d + adds
# ----------------------------------------------------------------------------- #
def _dw3x3(x, dwt, masks, img_w):
    """Depthwise 3x3 conv (padding=1), vectorized over all rows (= batch*channels).

    x:     (R, L)  rows = N*C, lanes = flattened H*W image (tail lanes zero-padded)
    dwt:   (R, 9)  per-row tap weights (per-channel weights tiled over batch)
    masks: (9, L)  per-tap validity masks (0 where the shifted source pixel would be
                   out of the image, or in the lane padding)
    One pltpu.roll (XLU) + one fused multiply-add per tap -- 9 vector ops total.
    """
    L = x.shape[-1]
    acc = None
    for t, (oy, ox) in enumerate(_TAPS):
        off = oy * img_w + ox                      # flat offset of the source pixel
        shifted = x if off == 0 else pltpu.roll(x, (-off) % L, 1)
        term = shifted * dwt[:, t:t + 1] * masks[t:t + 1, :]
        acc = term if acc is None else acc + term
    return acc


def _up_kernel(x1_ref, x2_ref, m1_ref, m2_ref, scat_ref,
               dw1_ref, dw2_ref, dw3_ref, bd1_ref, bd2_ref, bd3_ref,
               pmix_ref, bias_ref, out_ref, *, W1, W2, n_dec_rows):
    f32 = jnp.float32
    dot = functools.partial(jnp.dot, preferred_element_type=f32)

    # ---------------- Decoder: d = x1 + sep2(relu(sep1(x1))) ----------------
    x1 = x1_ref[...]                                   # (N*C1, L1)
    m1 = m1_ref[...]                                   # (9, L1)
    acc1 = _dw3x3(x1, dw1_ref[...], m1, W1)
    t1 = jnp.maximum(dot(bd1_ref[...], acc1), 0.0)     # block-diag 1x1 pointwise + ReLU
    acc2 = _dw3x3(t1, dw2_ref[...], m1, W1)
    d = x1 + dot(bd2_ref[...], acc2)                   # residual add

    # ---- ConvTranspose2d(k=2,s=2) + bias + F.pad: channel-mix dot + 4 scatter dots ----
    phases = dot(pmix_ref[...], d) + bias_ref[...]     # (4*N*C2, L1), rows = (a,b,n,co)
    up = None
    for ab in range(4):
        blk = phases[ab * n_dec_rows:(ab + 1) * n_dec_rows, :]   # (N*C2, L1)
        contrib = dot(blk, scat_ref[ab])                         # (N*C2, L2)
        up = contrib if up is None else up + contrib

    # ---------------- Skip path: sep3(x2), fused final add ----------------
    acc3 = _dw3x3(x2_ref[...], dw3_ref[...], m2_ref[...], W2)    # (N*C3, L2)
    skip = dot(bd3_ref[...], acc3)                               # (N*C2, L2)

    out_ref[...] = (up + skip).astype(out_ref.dtype)


# ----------------------------------------------------------------------------- #
# Wrapper: single fused pallas_call, NCHW in / NCHW out (PyTorch convention)
# ----------------------------------------------------------------------------- #
def up_forward(x1, x2, params):
    """Pallas port of Up.forward.  x1: (N, C1, H1, W1), x2: (N, C3, H2, W2), NCHW."""
    N, C1, H1, W1 = x1.shape
    Nb, C3, H2, W2 = x2.shape
    assert Nb == N
    C2 = params["up_b"].shape[0]
    f32 = jnp.float32

    HW1, HW2 = H1 * W1, H2 * W2
    L1 = _round_up(HW1, 128)           # lane-pad flattened spatial dims to 128 multiples
    L2 = _round_up(HW2, 128)

    # Host-built (shape-only) tables: tap validity masks + upsample/F.pad scatter.
    m1 = jnp.asarray(_tap_masks(H1, W1, L1))
    m2 = jnp.asarray(_tap_masks(H2, W2, L2))
    scat = jnp.asarray(_upsample_scatter(H1, W1, H2, W2, L1, L2))

    # Tiny parameter repacking (traced, runs once per call in the XLA graph):
    #   depthwise weights -> per-row (N*C, 9) tap tables
    #   pointwise / conv-transpose weights -> block-diagonal (over batch) mix matrices
    eyeN = jnp.eye(N, dtype=f32)
    dw1 = jnp.tile(params["dw1"].reshape(C1, 9).astype(f32), (N, 1))
    dw2 = jnp.tile(params["dw2"].reshape(C1, 9).astype(f32), (N, 1))
    dw3 = jnp.tile(params["dw3"].reshape(C3, 9).astype(f32), (N, 1))
    bd1 = jnp.kron(eyeN, params["pw1"].astype(f32))                 # (N*C1, N*C1)
    bd2 = jnp.kron(eyeN, params["pw2"].astype(f32))                 # (N*C1, N*C1)
    bd3 = jnp.kron(eyeN, params["pw3"].astype(f32))                 # (N*C2, N*C3)
    up_w = params["up_w"].astype(f32)                               # (C1, C2, 2, 2)
    pmix = jnp.concatenate(
        [jnp.kron(eyeN, up_w[:, :, a, b].T) for a in range(2) for b in range(2)],
        axis=0)                                                     # (4*N*C2, N*C1)
    biascol = jnp.tile(params["up_b"].astype(f32), 4 * N)[:, None]  # (4*N*C2, 1)

    # Flattened, lane-padded inputs (contiguous reshapes + tiny zero pads).
    x1f = jnp.pad(x1.astype(f32).reshape(N * C1, HW1), ((0, 0), (0, L1 - HW1)))
    x2f = jnp.pad(x2.astype(f32).reshape(N * C3, HW2), ((0, 0), (0, L2 - HW2)))

    kern = functools.partial(_up_kernel, W1=W1, W2=W2, n_dec_rows=N * C2)
    vmem = pl.BlockSpec(memory_space=pltpu.MemorySpace.VMEM)

    out_flat = pl.pallas_call(
        kern,
        out_shape=jax.ShapeDtypeStruct((N * C2, L2), x1.dtype),
        in_specs=[vmem] * 13,
        out_specs=vmem,
    )(x1f, x2f, m1, m2, scat, dw1, dw2, dw3, bd1, bd2, bd3, pmix, biascol)

    return out_flat[:, :HW2].reshape(N, C2, H2, W2)


# ----------------------------------------------------------------------------- #
# Pure-JAX reference (exact f32: only elementwise mults + reductions, no matmuls)
# ----------------------------------------------------------------------------- #
def _ref_sepconv(x, dw, pw):
    # x: (N, Ci, H, W); dw: (Ci, 3, 3); pw: (Co, Ci)
    N, Ci, H, W = x.shape
    xp = jnp.pad(x, ((0, 0), (0, 0), (1, 1), (1, 1)))
    acc = jnp.zeros_like(x)
    for dy in range(3):
        for dx in range(3):
            acc = acc + xp[:, :, dy:dy + H, dx:dx + W] * dw[None, :, dy, dx, None, None]
    return jnp.sum(acc[:, None] * pw[None, :, :, None, None], axis=2)


def _ref_up(x1, x2, params):
    C2 = params["up_b"].shape[0]
    # Decoder
    t = jnp.maximum(_ref_sepconv(x1, params["dw1"], params["pw1"]), 0.0)
    d = x1 + _ref_sepconv(t, params["dw2"], params["pw2"])
    # ConvTranspose2d(k=2, s=2) with bias
    N, Ci, H, W = d.shape
    w = params["up_w"]                                            # (Ci, Co, 2, 2)
    y = jnp.sum(d[:, :, None, :, :, None, None]
                * w[None, :, :, None, None, :, :], axis=1)        # (N, Co, H, W, 2, 2)
    y = jnp.transpose(y, (0, 1, 2, 4, 3, 5)).reshape(N, C2, 2 * H, 2 * W)
    y = y + params["up_b"][None, :, None, None]
    # F.pad to x2 spatial size
    H2, W2 = x2.shape[2], x2.shape[3]
    dY, dX = H2 - y.shape[2], W2 - y.shape[3]
    y = jnp.pad(y, ((0, 0), (0, 0),
                    (dY // 2, dY - dY // 2), (dX // 2, dX - dX // 2)))
    # skip path + residual add
    return y + _ref_sepconv(x2, params["dw3"], params["pw3"])


# ----------------------------------------------------------------------------- #
# Main
# ----------------------------------------------------------------------------- #
if __name__ == "__main__":
    # Up(in_channels=4, out_channels=4, sep_in_channels=8)
    C1, C2, C3 = 4, 4, 8
    N = 2
    H1 = W1 = 7        # x1 spatial -> upsampled to 14, padded to 16
    H2 = W2 = 16       # x2 spatial

    key = jax.random.PRNGKey(0)
    ks = jax.random.split(key, 10)

    # Parameter layouts (PyTorch-like):
    #   depthwise  : (C, 3, 3)       pointwise : (Cout, Cin)
    #   up weight  : (Cin, Cout, 2, 2)    up bias : (Cout,)
    params = {
        "dw1": 0.2 * jax.random.normal(ks[0], (C1, 3, 3), jnp.float32),
        "pw1": 0.2 * jax.random.normal(ks[1], (C1, C1), jnp.float32),
        "dw2": 0.2 * jax.random.normal(ks[2], (C1, 3, 3), jnp.float32),
        "pw2": 0.2 * jax.random.normal(ks[3], (C1, C1), jnp.float32),
        "dw3": 0.2 * jax.random.normal(ks[4], (C3, 3, 3), jnp.float32),
        "pw3": 0.2 * jax.random.normal(ks[5], (C2, C3), jnp.float32),
        "up_w": 0.2 * jax.random.normal(ks[6], (C1, C2, 2, 2), jnp.float32),
        "up_b": 0.2 * jax.random.normal(ks[7], (C2,), jnp.float32),
    }

    # Inputs in PyTorch NCHW convention.
    x1 = jax.random.normal(ks[8], (N, C1, H1, W1), jnp.float32)
    x2 = jax.random.normal(ks[9], (N, C3, H2, W2), jnp.float32)

    out = jax.block_until_ready(jax.jit(up_forward)(x1, x2, params))
    ref = jax.block_until_ready(_ref_up(x1, x2, params))

    assert out.shape == (N, C2, H2, W2), out.shape
    max_err = float(jnp.max(jnp.abs(out - ref)))
    # Tolerance covers MXU f32 pass rounding in the channel-mixing dots.
    assert jnp.allclose(out, ref, rtol=1e-2, atol=1e-2), max_err

    print("KERNEL_OK")
</pallas_src>

<mosaic_0001>
module attributes {stable_mosaic.version = 11 : i64} {
  func.func @_up_kernel(%arg0: memref<8x128xf32, #tpu.memory_space<vmem>>, %arg1: memref<16x256xf32, #tpu.memory_space<vmem>>, %arg2: memref<9x128xf32, #tpu.memory_space<vmem>>, %arg3: memref<9x256xf32, #tpu.memory_space<vmem>>, %arg4: memref<4x128x256xf32, #tpu.memory_space<vmem>>, %arg5: memref<8x9xf32, #tpu.memory_space<vmem>>, %arg6: memref<8x9xf32, #tpu.memory_space<vmem>>, %arg7: memref<16x9xf32, #tpu.memory_space<vmem>>, %arg8: memref<8x8xf32, #tpu.memory_space<vmem>>, %arg9: memref<8x8xf32, #tpu.memory_space<vmem>>, %arg10: memref<8x16xf32, #tpu.memory_space<vmem>>, %arg11: memref<32x8xf32, #tpu.memory_space<vmem>>, %arg12: memref<32x1xf32, #tpu.memory_space<vmem>>, %arg13: memref<8x256xf32, #tpu.memory_space<vmem>>) attributes {dimension_semantics = [], scalar_prefetch = 0 : i64, scratch_operands = 0 : i64, tpu.core_type = #tpu.core_type<tc>} {
    %c0 = arith.constant 0 : index
    %c0_0 = arith.constant 0 : index
    %0 = vector.load %arg0[%c0, %c0_0] : memref<8x128xf32, #tpu.memory_space<vmem>>, vector<8x128xf32>
    %c0_1 = arith.constant 0 : index
    %c0_2 = arith.constant 0 : index
    %1 = vector.load %arg2[%c0_1, %c0_2] : memref<9x128xf32, #tpu.memory_space<vmem>>, vector<9x128xf32>
    %c0_3 = arith.constant 0 : index
    %c0_4 = arith.constant 0 : index
    %2 = vector.load %arg5[%c0_3, %c0_4] : memref<8x9xf32, #tpu.memory_space<vmem>>, vector<8x9xf32>
    %c8_i32 = arith.constant 8 : i32
    %3 = tpu.dynamic_rotate %0 by %c8_i32 dim 1 : vector<8x128xf32>, i32 -> vector<8x128xf32>
    %4 = vector.extract_strided_slice %2 {offsets = [0, 0], sizes = [8, 1], strides = [1, 1]} : vector<8x9xf32> to vector<8x1xf32>
    %5 = vector.broadcast %4 : vector<8x1xf32> to vector<8x128xf32>
    %6 = arith.mulf %3, %5 : vector<8x128xf32>
    %7 = vector.extract_strided_slice %1 {offsets = [0, 0], sizes = [1, 128], strides = [1, 1]} : vector<9x128xf32> to vector<1x128xf32>
    %8 = vector.broadcast %7 : vector<1x128xf32> to vector<8x128xf32>
    %9 = arith.mulf %6, %8 : vector<8x128xf32>
    %c7_i32 = arith.constant 7 : i32
    %10 = tpu.dynamic_rotate %0 by %c7_i32 dim 1 : vector<8x128xf32>, i32 -> vector<8x128xf32>
    %11 = vector.extract_strided_slice %2 {offsets = [0, 1], sizes = [8, 1], strides = [1, 1]} : vector<8x9xf32> to vector<8x1xf32>
    %12 = vector.broadcast %11 : vector<8x1xf32> to vector<8x128xf32>
    %13 = arith.mulf %10, %12 : vector<8x128xf32>
    %14 = vector.extract_strided_slice %1 {offsets = [1, 0], sizes = [1, 128], strides = [1, 1]} : vector<9x128xf32> to vector<1x128xf32>
    %15 = vector.broadcast %14 : vector<1x128xf32> to vector<8x128xf32>
    %16 = arith.mulf %13, %15 : vector<8x128xf32>
    %17 = arith.addf %9, %16 : vector<8x128xf32>
    %c6_i32 = arith.constant 6 : i32
    %18 = tpu.dynamic_rotate %0 by %c6_i32 dim 1 : vector<8x128xf32>, i32 -> vector<8x128xf32>
    %19 = vector.extract_strided_slice %2 {offsets = [0, 2], sizes = [8, 1], strides = [1, 1]} : vector<8x9xf32> to vector<8x1xf32>
    %20 = vector.broadcast %19 : vector<8x1xf32> to vector<8x128xf32>
    %21 = arith.mulf %18, %20 : vector<8x128xf32>
    %22 = vector.extract_strided_slice %1 {offsets = [2, 0], sizes = [1, 128], strides = [1, 1]} : vector<9x128xf32> to vector<1x128xf32>
    %23 = vector.broadcast %22 : vector<1x128xf32> to vector<8x128xf32>
    %24 = arith.mulf %21, %23 : vector<8x128xf32>
    %25 = arith.addf %17, %24 : vector<8x128xf32>
    %c1_i32 = arith.constant 1 : i32
    %26 = tpu.dynamic_rotate %0 by %c1_i32 dim 1 : vector<8x128xf32>, i32 -> vector<8x128xf32>
    %27 = vector.extract_strided_slice %2 {offsets = [0, 3], sizes = [8, 1], strides = [1, 1]} : vector<8x9xf32> to vector<8x1xf32>
    %28 = vector.broadcast %27 : vector<8x1xf32> to vector<8x128xf32>
    %29 = arith.mulf %26, %28 : vector<8x128xf32>
    %30 = vector.extract_strided_slice %1 {offsets = [3, 0], sizes = [1, 128], strides = [1, 1]} : vector<9x128xf32> to vector<1x128xf32>
    %31 = vector.broadcast %30 : vector<1x128xf32> to vector<8x128xf32>
    %32 = arith.mulf %29, %31 : vector<8x128xf32>
    %33 = arith.addf %25, %32 : vector<8x128xf32>
    %34 = vector.extract_strided_slice %2 {offsets = [0, 4], sizes = [8, 1], strides = [1, 1]} : vector<8x9xf32> to vector<8x1xf32>
    %35 = vector.broadcast %34 : vector<8x1xf32> to vector<8x128xf32>
    %36 = arith.mulf %0, %35 : vector<8x128xf32>
    %37 = vector.extract_strided_slice %1 {offsets = [4, 0], sizes = [1, 128], strides = [1, 1]} : vector<9x128xf32> to vector<1x128xf32>
    %38 = vector.broadcast %37 : vector<1x128xf32> to vector<8x128xf32>
    %39 = arith.mulf %36, %38 : vector<8x128xf32>
    %40 = arith.addf %33, %39 : vector<8x128xf32>
    %c127_i32 = arith.constant 127 : i32
    %41 = tpu.dynamic_rotate %0 by %c127_i32 dim 1 : vector<8x128xf32>, i32 -> vector<8x128xf32>
    %42 = vector.extract_strided_slice %2 {offsets = [0, 5], sizes = [8, 1], strides = [1, 1]} : vector<8x9xf32> to vector<8x1xf32>
    %43 = vector.broadcast %42 : vector<8x1xf32> to vector<8x128xf32>
    %44 = arith.mulf %41, %43 : vector<8x128xf32>
    %45 = vector.extract_strided_slice %1 {offsets = [5, 0], sizes = [1, 128], strides = [1, 1]} : vector<9x128xf32> to vector<1x128xf32>
    %46 = vector.broadcast %45 : vector<1x128xf32> to vector<8x128xf32>
    %47 = arith.mulf %44, %46 : vector<8x128xf32>
    %48 = arith.addf %40, %47 : vector<8x128xf32>
    %c122_i32 = arith.constant 122 : i32
    %49 = tpu.dynamic_rotate %0 by %c122_i32 dim 1 : vector<8x128xf32>, i32 -> vector<8x128xf32>
    %50 = vector.extract_strided_slice %2 {offsets = [0, 6], sizes = [8, 1], strides = [1, 1]} : vector<8x9xf32> to vector<8x1xf32>
    %51 = vector.broadcast %50 : vector<8x1xf32> to vector<8x128xf32>
    %52 = arith.mulf %49, %51 : vector<8x128xf32>
    %53 = vector.extract_strided_slice %1 {offsets = [6, 0], sizes = [1, 128], strides = [1, 1]} : vector<9x128xf32> to vector<1x128xf32>
    %54 = vector.broadcast %53 : vector<1x128xf32> to vector<8x128xf32>
    %55 = arith.mulf %52, %54 : vector<8x128xf32>
    %56 = arith.addf %48, %55 : vector<8x128xf32>
    %c121_i32 = arith.constant 121 : i32
    %57 = tpu.dynamic_rotate %0 by %c121_i32 dim 1 : vector<8x128xf32>, i32 -> vector<8x128xf32>
    %58 = vector.extract_strided_slice %2 {offsets = [0, 7], sizes = [8, 1], strides = [1, 1]} : vector<8x9xf32> to vector<8x1xf32>
    %59 = vector.broadcast %58 : vector<8x1xf32> to vector<8x128xf32>
    %60 = arith.mulf %57, %59 : vector<8x128xf32>
    %61 = vector.extract_strided_slice %1 {offsets = [7, 0], sizes = [1, 128], strides = [1, 1]} : vector<9x128xf32> to vector<1x128xf32>
    %62 = vector.broadcast %61 : vector<1x128xf32> to vector<8x128xf32>
    %63 = arith.mulf %60, %62 : vector<8x128xf32>
    %64 = arith.addf %56, %63 : vector<8x128xf32>
    %c120_i32 = arith.constant 120 : i32
    %65 = tpu.dynamic_rotate %0 by %c120_i32 dim 1 : vector<8x128xf32>, i32 -> vector<8x128xf32>
    %66 = vector.extract_strided_slice %2 {offsets = [0, 8], sizes = [8, 1], strides = [1, 1]} : vector<8x9xf32> to vector<8x1xf32>
    %67 = vector.broadcast %66 : vector<8x1xf32> to vector<8x128xf32>
    %68 = arith.mulf %65, %67 : vector<8x128xf32>
    %69 = vector.extract_strided_slice %1 {offsets = [8, 0], sizes = [1, 128], strides = [1, 1]} : vector<9x128xf32> to vector<1x128xf32>
    %70 = vector.broadcast %69 : vector<1x128xf32> to vector<8x128xf32>
    %71 = arith.mulf %68, %70 : vector<8x128xf32>
    %72 = arith.addf %64, %71 : vector<8x128xf32>
    %c0_5 = arith.constant 0 : index
    %c0_6 = arith.constant 0 : index
    %73 = vector.load %arg8[%c0_5, %c0_6] : memref<8x8xf32, #tpu.memory_space<vmem>>, vector<8x8xf32>
    %cst = arith.constant dense<0.000000e+00> : vector<8x128xf32>
    %74 = tpu.matmul %73, %72, %cst {dimension_numbers = #tpu.dot_dimension_numbers<[1], [0], [0], [1], [0, 0, 1, 1], [], []>} : vector<8x8xf32>, vector<8x128xf32>, vector<8x128xf32> -> vector<8x128xf32>
    %cst_7 = arith.constant 0.000000e+00 : f32
    %75 = vector.broadcast %cst_7 : f32 to vector<8x128xf32>
    %76 = arith.maximumf %74, %75 : vector<8x128xf32>
    %c0_8 = arith.constant 0 : index
    %c0_9 = arith.constant 0 : index
    %77 = vector.load %arg6[%c0_8, %c0_9] : memref<8x9xf32, #tpu.memory_space<vmem>>, vector<8x9xf32>
    %c8_i32_10 = arith.constant 8 : i32
    %78 = tpu.dynamic_rotate %76 by %c8_i32_10 dim 1 : vector<8x128xf32>, i32 -> vector<8x128xf32>
    %79 = vector.extract_strided_slice %77 {offsets = [0, 0], sizes = [8, 1], strides = [1, 1]} : vector<8x9xf32> to vector<8x1xf32>
    %80 = vector.broadcast %79 : vector<8x1xf32> to vector<8x128xf32>
    %81 = arith.mulf %78, %80 : vector<8x128xf32>
    %82 = vector.extract_strided_slice %1 {offsets = [0, 0], sizes = [1, 128], strides = [1, 1]} : vector<9x128xf32> to vector<1x128xf32>
    %83 = vector.broadcast %82 : vector<1x128xf32> to vector<8x128xf32>
    %84 = arith.mulf %81, %83 : vector<8x128xf32>
    %c7_i32_11 = arith.constant 7 : i32
    %85 = tpu.dynamic_rotate %76 by %c7_i32_11 dim 1 : vector<8x128xf32>, i32 -> vector<8x128xf32>
    %86 = vector.extract_strided_slice %77 {offsets = [0, 1], sizes = [8, 1], strides = [1, 1]} : vector<8x9xf32> to vector<8x1xf32>
    %87 = vector.broadcast %86 : vector<8x1xf32> to vector<8x128xf32>
    %88 = arith.mulf %85, %87 : vector<8x128xf32>
    %89 = vector.extract_strided_slice %1 {offsets = [1, 0], sizes = [1, 128], strides = [1, 1]} : vector<9x128xf32> to vector<1x128xf32>
    %90 = vector.broadcast %89 : vector<1x128xf32> to vector<8x128xf32>
    %91 = arith.mulf %88, %90 : vector<8x128xf32>
    %92 = arith.addf %84, %91 : vector<8x128xf32>
    %c6_i32_12 = arith.constant 6 : i32
    %93 = tpu.dynamic_rotate %76 by %c6_i32_12 dim 1 : vector<8x128xf32>, i32 -> vector<8x128xf32>
    %94 = vector.extract_strided_slice %77 {offsets = [0, 2], sizes = [8, 1], strides = [1, 1]} : vector<8x9xf32> to vector<8x1xf32>
    %95 = vector.broadcast %94 : vector<8x1xf32> to vector<8x128xf32>
    %96 = arith.mulf %93, %95 : vector<8x128xf32>
    %97 = vector.extract_strided_slice %1 {offsets = [2, 0], sizes = [1, 128], strides = [1, 1]} : vector<9x128xf32> to vector<1x128xf32>
    %98 = vector.broadcast %97 : vector<1x128xf32> to vector<8x128xf32>
    %99 = arith.mulf %96, %98 : vector<8x128xf32>
    %100 = arith.addf %92, %99 : vector<8x128xf32>
    %c1_i32_13 = arith.constant 1 : i32
    %101 = tpu.dynamic_rotate %76 by %c1_i32_13 dim 1 : vector<8x128xf32>, i32 -> vector<8x128xf32>
    %102 = vector.extract_strided_slice %77 {offsets = [0, 3], sizes = [8, 1], strides = [1, 1]} : vector<8x9xf32> to vector<8x1xf32>
    %103 = vector.broadcast %102 : vector<8x1xf32> to vector<8x128xf32>
    %104 = arith.mulf %101, %103 : vector<8x128xf32>
    %105 = vector.extract_strided_slice %1 {offsets = [3, 0], sizes = [1, 128], strides = [1, 1]} : vector<9x128xf32> to vector<1x128xf32>
    %106 = vector.broadcast %105 : vector<1x128xf32> to vector<8x128xf32>
    %107 = arith.mulf %104, %106 : vector<8x128xf32>
    %108 = arith.addf %100, %107 : vector<8x128xf32>
    %109 = vector.extract_strided_slice %77 {offsets = [0, 4], sizes = [8, 1], strides = [1, 1]} : vector<8x9xf32> to vector<8x1xf32>
    %110 = vector.broadcast %109 : vector<8x1xf32> to vector<8x128xf32>
    %111 = arith.mulf %76, %110 : vector<8x128xf32>
    %112 = vector.extract_strided_slice %1 {offsets = [4, 0], sizes = [1, 128], strides = [1, 1]} : vector<9x128xf32> to vector<1x128xf32>
    %113 = vector.broadcast %112 : vector<1x128xf32> to vector<8x128xf32>
    %114 = arith.mulf %111, %113 : vector<8x128xf32>
    %115 = arith.addf %108, %114 : vector<8x128xf32>
    %c127_i32_14 = arith.constant 127 : i32
    %116 = tpu.dynamic_rotate %76 by %c127_i32_14 dim 1 : vector<8x128xf32>, i32 -> vector<8x128xf32>
    %117 = vector.extract_strided_slice %77 {offsets = [0, 5], sizes = [8, 1], strides = [1, 1]} : vector<8x9xf32> to vector<8x1xf32>
    %118 = vector.broadcast %117 : vector<8x1xf32> to vector<8x128xf32>
    %119 = arith.mulf %116, %118 : vector<8x128xf32>
    %120 = vector.extract_strided_slice %1 {offsets = [5, 0], sizes = [1, 128], strides = [1, 1]} : vector<9x128xf32> to vector<1x128xf32>
    %121 = vector.broadcast %120 : vector<1x128xf32> to vector<8x128xf32>
    %122 = arith.mulf %119, %121 : vector<8x128xf32>
    %123 = arith.addf %115, %122 : vector<8x128xf32>
    %c122_i32_15 = arith.constant 122 : i32
    %124 = tpu.dynamic_rotate %76 by %c122_i32_15 dim 1 : vector<8x128xf32>, i32 -> vector<8x128xf32>
    %125 = vector.extract_strided_slice %77 {offsets = [0, 6], sizes = [8, 1], strides = [1, 1]} : vector<8x9xf32> to vector<8x1xf32>
    %126 = vector.broadcast %125 : vector<8x1xf32> to vector<8x128xf32>
    %127 = arith.mulf %124, %126 : vector<8x128xf32>
    %128 = vector.extract_strided_slice %1 {offsets = [6, 0], sizes = [1, 128], strides = [1, 1]} : vector<9x128xf32> to vector<1x128xf32>
    %129 = vector.broadcast %128 : vector<1x128xf32> to vector<8x128xf32>
    %130 = arith.mulf %127, %129 : vector<8x128xf32>
    %131 = arith.addf %123, %130 : vector<8x128xf32>
    %c121_i32_16 = arith.constant 121 : i32
    %132 = tpu.dynamic_rotate %76 by %c121_i32_16 dim 1 : vector<8x128xf32>, i32 -> vector<8x128xf32>
    %133 = vector.extract_strided_slice %77 {offsets = [0, 7], sizes = [8, 1], strides = [1, 1]} : vector<8x9xf32> to vector<8x1xf32>
    %134 = vector.broadcast %133 : vector<8x1xf32> to vector<8x128xf32>
    %135 = arith.mulf %132, %134 : vector<8x128xf32>
    %136 = vector.extract_strided_slice %1 {offsets = [7, 0], sizes = [1, 128], strides = [1, 1]} : vector<9x128xf32> to vector<1x128xf32>
    %137 = vector.broadcast %136 : vector<1x128xf32> to vector<8x128xf32>
    %138 = arith.mulf %135, %137 : vector<8x128xf32>
    %139 = arith.addf %131, %138 : vector<8x128xf32>
    %c120_i32_17 = arith.constant 120 : i32
    %140 = tpu.dynamic_rotate %76 by %c120_i32_17 dim 1 : vector<8x128xf32>, i32 -> vector<8x128xf32>
    %141 = vector.extract_strided_slice %77 {offsets = [0, 8], sizes = [8, 1], strides = [1, 1]} : vector<8x9xf32> to vector<8x1xf32>
    %142 = vector.broadcast %141 : vector<8x1xf32> to vector<8x128xf32>
    %143 = arith.mulf %140, %142 : vector<8x128xf32>
    %144 = vector.extract_strided_slice %1 {offsets = [8, 0], sizes = [1, 128], strides = [1, 1]} : vector<9x128xf32> to vector<1x128xf32>
    %145 = vector.broadcast %144 : vector<1x128xf32> to vector<8x128xf32>
    %146 = arith.mulf %143, %145 : vector<8x128xf32>
    %147 = arith.addf %139, %146 : vector<8x128xf32>
    %c0_18 = arith.constant 0 : index
    %c0_19 = arith.constant 0 : index
    %148 = vector.load %arg9[%c0_18, %c0_19] : memref<8x8xf32, #tpu.memory_space<vmem>>, vector<8x8xf32>
    %cst_20 = arith.constant dense<0.000000e+00> : vector<8x128xf32>
    %149 = tpu.matmul %148, %147, %cst_20 {dimension_numbers = #tpu.dot_dimension_numbers<[1], [0], [0], [1], [0, 0, 1, 1], [], []>} : vector<8x8xf32>, vector<8x128xf32>, vector<8x128xf32> -> vector<8x128xf32>
    %150 = arith.addf %0, %149 : vector<8x128xf32>
    %c0_21 = arith.constant 0 : index
    %c0_22 = arith.constant 0 : index
    %151 = vector.load %arg11[%c0_21, %c0_22] : memref<32x8xf32, #tpu.memory_space<vmem>>, vector<32x8xf32>
    %cst_23 = arith.constant dense<0.000000e+00> : vector<32x128xf32>
    %152 = tpu.matmul %151, %150, %cst_23 {dimension_numbers = #tpu.dot_dimension_numbers<[1], [0], [0], [1], [0, 0, 1, 1], [], []>} : vector<32x8xf32>, vector<8x128xf32>, vector<32x128xf32> -> vector<32x128xf32>
    %c0_24 = arith.constant 0 : index
    %c0_25 = arith.constant 0 : index
    %153 = vector.load %arg12[%c0_24, %c0_25] : memref<32x1xf32, #tpu.memory_space<vmem>>, vector<32x1xf32>
    %154 = vector.broadcast %153 : vector<32x1xf32> to vector<32x128xf32>
    %155 = arith.addf %152, %154 : vector<32x128xf32>
    %156 = vector.extract_strided_slice %155 {offsets = [0, 0], sizes = [8, 128], strides = [1, 1]} : vector<32x128xf32> to vector<8x128xf32>
    %c0_26 = arith.constant 0 : index
    %c0_27 = arith.constant 0 : index
    %c0_28 = arith.constant 0 : index
    %157 = vector.load %arg4[%c0_26, %c0_27, %c0_28] : memref<4x128x256xf32, #tpu.memory_space<vmem>>, vector<1x128x256xf32>
    %158 = vector.shape_cast %157 : vector<1x128x256xf32> to vector<128x256xf32>
    %cst_29 = arith.constant dense<0.000000e+00> : vector<8x256xf32>
    %159 = tpu.matmul %156, %158, %cst_29 {dimension_numbers = #tpu.dot_dimension_numbers<[1], [0], [0], [1], [0, 0, 1, 1], [], []>} : vector<8x128xf32>, vector<128x256xf32>, vector<8x256xf32> -> vector<8x256xf32>
    %160 = vector.extract_strided_slice %155 {offsets = [8, 0], sizes = [8, 128], strides = [1, 1]} : vector<32x128xf32> to vector<8x128xf32>
    %c1 = arith.constant 1 : index
    %c0_30 = arith.constant 0 : index
    %c0_31 = arith.constant 0 : index
    %161 = vector.load %arg4[%c1, %c0_30, %c0_31] : memref<4x128x256xf32, #tpu.memory_space<vmem>>, vector<1x128x256xf32>
    %162 = vector.shape_cast %161 : vector<1x128x256xf32> to vector<128x256xf32>
    %cst_32 = arith.constant dense<0.000000e+00> : vector<8x256xf32>
    %163 = tpu.matmul %160, %162, %cst_32 {dimension_numbers = #tpu.dot_dimension_numbers<[1], [0], [0], [1], [0, 0, 1, 1], [], []>} : vector<8x128xf32>, vector<128x256xf32>, vector<8x256xf32> -> vector<8x256xf32>
    %164 = arith.addf %159, %163 : vector<8x256xf32>
    %165 = vector.extract_strided_slice %155 {offsets = [16, 0], sizes = [8, 128], strides = [1, 1]} : vector<32x128xf32> to vector<8x128xf32>
    %c2 = arith.constant 2 : index
    %c0_33 = arith.constant 0 : index
    %c0_34 = arith.constant 0 : index
    %166 = vector.load %arg4[%c2, %c0_33, %c0_34] : memref<4x128x256xf32, #tpu.memory_space<vmem>>, vector<1x128x256xf32>
    %167 = vector.shape_cast %166 : vector<1x128x256xf32> to vector<128x256xf32>
    %cst_35 = arith.constant dense<0.000000e+00> : vector<8x256xf32>
    %168 = tpu.matmul %165, %167, %cst_35 {dimension_numbers = #tpu.dot_dimension_numbers<[1], [0], [0], [1], [0, 0, 1, 1], [], []>} : vector<8x128xf32>, vector<128x256xf32>, vector<8x256xf32> -> vector<8x256xf32>
    %169 = arith.addf %164, %168 : vector<8x256xf32>
    %170 = vector.extract_strided_slice %155 {offsets = [24, 0], sizes = [8, 128], strides = [1, 1]} : vector<32x128xf32> to vector<8x128xf32>
    %c3 = arith.constant 3 : index
    %c0_36 = arith.constant 0 : index
    %c0_37 = arith.constant 0 : index
    %171 = vector.load %arg4[%c3, %c0_36, %c0_37] : memref<4x128x256xf32, #tpu.memory_space<vmem>>, vector<1x128x256xf32>
    %172 = vector.shape_cast %171 : vector<1x128x256xf32> to vector<128x256xf32>
    %cst_38 = arith.constant dense<0.000000e+00> : vector<8x256xf32>
    %173 = tpu.matmul %170, %172, %cst_38 {dimension_numbers = #tpu.dot_dimension_numbers<[1], [0], [0], [1], [0, 0, 1, 1], [], []>} : vector<8x128xf32>, vector<128x256xf32>, vector<8x256xf32> -> vector<8x256xf32>
    %174 = arith.addf %169, %173 : vector<8x256xf32>
    %c0_39 = arith.constant 0 : index
    %c0_40 = arith.constant 0 : index
    %175 = vector.load %arg1[%c0_39, %c0_40] : memref<16x256xf32, #tpu.memory_space<vmem>>, vector<16x256xf32>
    %c0_41 = arith.constant 0 : index
    %c0_42 = arith.constant 0 : index
    %176 = vector.load %arg7[%c0_41, %c0_42] : memref<16x9xf32, #tpu.memory_space<vmem>>, vector<16x9xf32>
    %c0_43 = arith.constant 0 : index
    %c0_44 = arith.constant 0 : index
    %177 = vector.load %arg3[%c0_43, %c0_44] : memref<9x256xf32, #tpu.memory_space<vmem>>, vector<9x256xf32>
    %c17_i32 = arith.constant 17 : i32
    %178 = tpu.dynamic_rotate %175 by %c17_i32 dim 1 : vector<16x256xf32>, i32 -> vector<16x256xf32>
    %179 = vector.extract_strided_slice %176 {offsets = [0, 0], sizes = [16, 1], strides = [1, 1]} : vector<16x9xf32> to vector<16x1xf32>
    %180 = vector.broadcast %179 : vector<16x1xf32> to vector<16x256xf32>
    %181 = arith.mulf %178, %180 : vector<16x256xf32>
    %182 = vector.extract_strided_slice %177 {offsets = [0, 0], sizes = [1, 256], strides = [1, 1]} : vector<9x256xf32> to vector<1x256xf32>
    %183 = vector.broadcast %182 : vector<1x256xf32> to vector<16x256xf32>
    %184 = arith.mulf %181, %183 : vector<16x256xf32>
    %c16_i32 = arith.constant 16 : i32
    %185 = tpu.dynamic_rotate %175 by %c16_i32 dim 1 : vector<16x256xf32>, i32 -> vector<16x256xf32>
    %186 = vector.extract_strided_slice %176 {offsets = [0, 1], sizes = [16, 1], strides = [1, 1]} : vector<16x9xf32> to vector<16x1xf32>
    %187 = vector.broadcast %186 : vector<16x1xf32> to vector<16x256xf32>
    %188 = arith.mulf %185, %187 : vector<16x256xf32>
    %189 = vector.extract_strided_slice %177 {offsets = [1, 0], sizes = [1, 256], strides = [1, 1]} : vector<9x256xf32> to vector<1x256xf32>
    %190 = vector.broadcast %189 : vector<1x256xf32> to vector<16x256xf32>
    %191 = arith.mulf %188, %190 : vector<16x256xf32>
    %192 = arith.addf %184, %191 : vector<16x256xf32>
    %c15_i32 = arith.constant 15 : i32
    %193 = tpu.dynamic_rotate %175 by %c15_i32 dim 1 : vector<16x256xf32>, i32 -> vector<16x256xf32>
    %194 = vector.extract_strided_slice %176 {offsets = [0, 2], sizes = [16, 1], strides = [1, 1]} : vector<16x9xf32> to vector<16x1xf32>
    %195 = vector.broadcast %194 : vector<16x1xf32> to vector<16x256xf32>
    %196 = arith.mulf %193, %195 : vector<16x256xf32>
    %197 = vector.extract_strided_slice %177 {offsets = [2, 0], sizes = [1, 256], strides = [1, 1]} : vector<9x256xf32> to vector<1x256xf32>
    %198 = vector.broadcast %197 : vector<1x256xf32> to vector<16x256xf32>
    %199 = arith.mulf %196, %198 : vector<16x256xf32>
    %200 = arith.addf %192, %199 : vector<16x256xf32>
    %c1_i32_45 = arith.constant 1 : i32
    %201 = tpu.dynamic_rotate %175 by %c1_i32_45 dim 1 : vector<16x256xf32>, i32 -> vector<16x256xf32>
    %202 = vector.extract_strided_slice %176 {offsets = [0, 3], sizes = [16, 1], strides = [1, 1]} : vector<16x9xf32> to vector<16x1xf32>
    %203 = vector.broadcast %202 : vector<16x1xf32> to vector<16x256xf32>
    %204 = arith.mulf %201, %203 : vector<16x256xf32>
    %205 = vector.extract_strided_slice %177 {offsets = [3, 0], sizes = [1, 256], strides = [1, 1]} : vector<9x256xf32> to vector<1x256xf32>
    %206 = vector.broadcast %205 : vector<1x256xf32> to vector<16x256xf32>
    %207 = arith.mulf %204, %206 : vector<16x256xf32>
    %208 = arith.addf %200, %207 : vector<16x256xf32>
    %209 = vector.extract_strided_slice %176 {offsets = [0, 4], sizes = [16, 1], strides = [1, 1]} : vector<16x9xf32> to vector<16x1xf32>
    %210 = vector.broadcast %209 : vector<16x1xf32> to vector<16x256xf32>
    %211 = arith.mulf %175, %210 : vector<16x256xf32>
    %212 = vector.extract_strided_slice %177 {offsets = [4, 0], sizes = [1, 256], strides = [1, 1]} : vector<9x256xf32> to vector<1x256xf32>
    %213 = vector.broadcast %212 : vector<1x256xf32> to vector<16x256xf32>
    %214 = arith.mulf %211, %213 : vector<16x256xf32>
    %215 = arith.addf %208, %214 : vector<16x256xf32>
    %c255_i32 = arith.constant 255 : i32
    %216 = tpu.dynamic_rotate %175 by %c255_i32 dim 1 : vector<16x256xf32>, i32 -> vector<16x256xf32>
    %217 = vector.extract_strided_slice %176 {offsets = [0, 5], sizes = [16, 1], strides = [1, 1]} : vector<16x9xf32> to vector<16x1xf32>
    %218 = vector.broadcast %217 : vector<16x1xf32> to vector<16x256xf32>
    %219 = arith.mulf %216, %218 : vector<16x256xf32>
    %220 = vector.extract_strided_slice %177 {offsets = [5, 0], sizes = [1, 256], strides = [1, 1]} : vector<9x256xf32> to vector<1x256xf32>
    %221 = vector.broadcast %220 : vector<1x256xf32> to vector<16x256xf32>
    %222 = arith.mulf %219, %221 : vector<16x256xf32>
    %223 = arith.addf %215, %222 : vector<16x256xf32>
    %c241_i32 = arith.constant 241 : i32
    %224 = tpu.dynamic_rotate %175 by %c241_i32 dim 1 : vector<16x256xf32>, i32 -> vector<16x256xf32>
    %225 = vector.extract_strided_slice %176 {offsets = [0, 6], sizes = [16, 1], strides = [1, 1]} : vector<16x9xf32> to vector<16x1xf32>
    %226 = vector.broadcast %225 : vector<16x1xf32> to vector<16x256xf32>
    %227 = arith.mulf %224, %226 : vector<16x256xf32>
    %228 = vector.extract_strided_slice %177 {offsets = [6, 0], sizes = [1, 256], strides = [1, 1]} : vector<9x256xf32> to vector<1x256xf32>
    %229 = vector.broadcast %228 : vector<1x256xf32> to vector<16x256xf32>
    %230 = arith.mulf %227, %229 : vector<16x256xf32>
    %231 = arith.addf %223, %230 : vector<16x256xf32>
    %c240_i32 = arith.constant 240 : i32
    %232 = tpu.dynamic_rotate %175 by %c240_i32 dim 1 : vector<16x256xf32>, i32 -> vector<16x256xf32>
    %233 = vector.extract_strided_slice %176 {offsets = [0, 7], sizes = [16, 1], strides = [1, 1]} : vector<16x9xf32> to vector<16x1xf32>
    %234 = vector.broadcast %233 : vector<16x1xf32> to vector<16x256xf32>
    %235 = arith.mulf %232, %234 : vector<16x256xf32>
    %236 = vector.extract_strided_slice %177 {offsets = [7, 0], sizes = [1, 256], strides = [1, 1]} : vector<9x256xf32> to vector<1x256xf32>
    %237 = vector.broadcast %236 : vector<1x256xf32> to vector<16x256xf32>
    %238 = arith.mulf %235, %237 : vector<16x256xf32>
    %239 = arith.addf %231, %238 : vector<16x256xf32>
    %c239_i32 = arith.constant 239 : i32
    %240 = tpu.dynamic_rotate %175 by %c239_i32 dim 1 : vector<16x256xf32>, i32 -> vector<16x256xf32>
    %241 = vector.extract_strided_slice %176 {offsets = [0, 8], sizes = [16, 1], strides = [1, 1]} : vector<16x9xf32> to vector<16x1xf32>
    %242 = vector.broadcast %241 : vector<16x1xf32> to vector<16x256xf32>
    %243 = arith.mulf %240, %242 : vector<16x256xf32>
    %244 = vector.extract_strided_slice %177 {offsets = [8, 0], sizes = [1, 256], strides = [1, 1]} : vector<9x256xf32> to vector<1x256xf32>
    %245 = vector.broadcast %244 : vector<1x256xf32> to vector<16x256xf32>
    %246 = arith.mulf %243, %245 : vector<16x256xf32>
    %247 = arith.addf %239, %246 : vector<16x256xf32>
    %c0_46 = arith.constant 0 : index
    %c0_47 = arith.constant 0 : index
    %248 = vector.load %arg10[%c0_46, %c0_47] : memref<8x16xf32, #tpu.memory_space<vmem>>, vector<8x16xf32>
    %cst_48 = arith.constant dense<0.000000e+00> : vector<8x256xf32>
    %249 = tpu.matmul %248, %247, %cst_48 {dimension_numbers = #tpu.dot_dimension_numbers<[1], [0], [0], [1], [0, 0, 1, 1], [], []>} : vector<8x16xf32>, vector<16x256xf32>, vector<8x256xf32> -> vector<8x256xf32>
    %250 = arith.addf %174, %249 : vector<8x256xf32>
    %c0_49 = arith.constant 0 : index
    %c0_50 = arith.constant 0 : index
    %251 = vector.load %arg13[%c0_49, %c0_50] : memref<8x256xf32, #tpu.memory_space<vmem>>, vector<8x256xf32>
    tpu.vector_store %arg13[%c0_49, %c0_50], %250 {strides = array<i32>} : memref<8x256xf32, #tpu.memory_space<vmem>>, vector<8x256xf32>,
    return
  }
}

</mosaic_0001>

<llo_original>
// kernel: tile.32
$region0: #{tile.32}
  #allocation2 [shape = 's32[1]{0}', space=sflag, size = 0x4, scoped, tag = 'scoped memory for tile.32']
  %s0 = inlined_call_operand.hbm [shape: f32[4], index: 0, kind: input, shape index: {}]
  %s1 = inlined_call_operand.vmem [shape: f32[8,4], index: 1, kind: output, shape index: {}]
  $region1: #{tile.32} parent=0
    #allocation0 [shape = 'u8[512]{0}', space=vmem, size = 0x400, scoped, tag = 'operand span for operand 0']
    #allocation1 [shape = 's32[1]{0}', space=sflag, size = 0x4, scoped, tag = 'scoped memory for tile.32']
    %2 = vsyncpa [#allocation1], 0
    // Predicated region
    $region2: #{tile.32} parent=1 // pred_check
      _
    $region3: #{tile.32} parent=1 // pred_check_branch
      %4 = sbr.rel (0) target = $region5
    $region4: #{tile.32} parent=1 // pred_region
      %s6 = ssub.s32 16, 16
      %7 = vsyncadd [#allocation1], %s6
      %s9 = sshll.u32 [#allocation0], 4
      %s10 = int_to_ptr.vmem [resolvable:$true] %s9
      %12 = dma.hbm_to_vmem [thread:$0]  %s0, 16, %s10, [#allocation1]
    $region5: #{tile.32} parent=1 // pred_fallthru
      _
    // Predicated region
    $region6: #{tile.32} parent=1 // pred_check
      _
    $region7: #{tile.32} parent=1 // pred_check_branch
      %14 = sbr.rel (0) target = $region9
    $region8: #{tile.32} parent=1 // pred_region
      %15 = dma.done [#allocation1], 16
    $region9: #{tile.32} parent=1 // pred_fallthru
      _
    %v16 = vld [vmem:[#allocation0] ss:$0 sm:$0xff]
    %17 = vst [vmem:[%s1] sm:$0xff] %v16
    %18 = vsyncpa [#allocation1], 1

// kernel: tile.0
$region0: #{tile.0}
  %s0 = inlined_call_operand.vmem [shape: f32[8,4], index: 0, kind: input, shape index: {}]
  %s1 = inlined_call_operand.vmem [shape: f32[32,1], index: 1, kind: output, shape index: {}]
  %v2 = vld [vmem:[%s0] sm:$0xff]
  %vm3 = vcmask 7168
  %4 = vst.msk [vmem:[%s1] ss:$4 sm:$0xff] %vm3, %v2
  %v5 = vld [vmem:[%s0] sm:$0xff]
  %6 = vrot.lane.b32.xlu0 %v5, 127
  %v7 = vpop.permute.xlu0 %6
  %vm8 = vcmask 7168
  %s9 = scalar_lea.vmem %s1, 1
  %10 = vst.msk [vmem:[%s9] ss:$4 sm:$0xff] %vm8, %v7
  %v11 = vld [vmem:[%s0] sm:$0xff]
  %12 = vrot.lane.b32.xlu0 %v11, 126
  %v13 = vpop.permute.xlu0 %12
  %vm14 = vcmask 7168
  %s15 = scalar_lea.vmem %s1, 2
  %16 = vst.msk [vmem:[%s15] ss:$4 sm:$0xff] %vm14, %v13
  %v17 = vld [vmem:[%s0] sm:$0xff]
  %18 = vrot.lane.b32.xlu0 %v17, 125
  %v19 = vpop.permute.xlu0 %18
  %vm20 = vcmask 7168
  %s21 = scalar_lea.vmem %s1, 3
  %22 = vst.msk [vmem:[%s21] ss:$4 sm:$0xff] %vm20, %v19

// kernel: up_forward.1
$region0: #{up_forward.1}
  #allocation0 [shape = 'u32[]', space=smem, size = 0x4, offset = 0x4, fixed_abs, tag = 'smem constant byte address 0x4 - core index']
  #allocation1 [shape = 'u32[144,128]{1,0:T(1,128)}', space=vmem, size = 0x12000, scoped, tag = 'internal scratch']
  %s0 = inlined_call_operand.vmem [shape: f32[8,128], index: 0, kind: input, shape index: {}]
  %s1 = inlined_call_operand.vmem [shape: f32[16,256], index: 1, kind: input, shape index: {}]
  %s2 = inlined_call_operand.vmem [shape: f32[9,128], index: 2, kind: input, shape index: {}]
  %s3 = inlined_call_operand.vmem [shape: f32[9,256], index: 3, kind: input, shape index: {}]
  %s4 = inlined_call_operand.vmem [shape: f32[4,128,256], index: 4, kind: input, shape index: {}]
  %s5 = inlined_call_operand.vmem [shape: f32[8,9], index: 5, kind: input, shape index: {}]
  %s6 = inlined_call_operand.vmem [shape: f32[8,9], index: 6, kind: input, shape index: {}]
  %s7 = inlined_call_operand.vmem [shape: f32[16,9], index: 7, kind: input, shape index: {}]
  %s8 = inlined_call_operand.vmem [shape: f32[8,8], index: 8, kind: input, shape index: {}]
  %s9 = inlined_call_operand.vmem [shape: f32[8,8], index: 9, kind: input, shape index: {}]
  %s10 = inlined_call_operand.vmem [shape: f32[8,16], index: 10, kind: input, shape index: {}]
  %s11 = inlined_call_operand.vmem [shape: f32[32,8], index: 11, kind: input, shape index: {}]
  %s12 = inlined_call_operand.vmem [shape: f32[32,1], index: 12, kind: input, shape index: {}]
  %s13 = inlined_call_operand.vmem [shape: f32[8,256], index: 13, kind: output, shape index: {}]
  %s14 = sld [smem:[#allocation0]]
  $region62: #{up_forward.1} parent=0
    _
  %s16 = ssub.s32 1, %s14
  %s17 = scalar_select 0, %s16, %s14
  // Predicated region
  $region2: #{up_forward.1} parent=0 // pred_check
    _
  $region3: #{up_forward.1} parent=0 // pred_check_branch
    %19 = sbr.rel (0) target = $region5
  $region4: #{up_forward.1} parent=0 // pred_region
    _
  $region5: #{up_forward.1} parent=0 // pred_fallthru
    _
  // Predicated region
  $region6: #{up_forward.1} parent=0 // pred_check
    _
  $region7: #{up_forward.1} parent=0 // pred_check_branch
    %21 = sbr.rel (0) target = $region9
  $region8: #{up_forward.1} parent=0 // pred_region
    _
  $region9: #{up_forward.1} parent=0 // pred_fallthru
    _
  // Predicated region
  $region10: #{up_forward.1} parent=0 // pred_check
    _
  $region11: #{up_forward.1} parent=0 // pred_check_branch
    %23 = sbr.rel (0) target = $region13
  $region12: #{up_forward.1} parent=0 // pred_region
    _
  $region13: #{up_forward.1} parent=0 // pred_fallthru
    _
  // Predicated region
  $region14: #{up_forward.1} parent=0 // pred_check
    _
  $region15: #{up_forward.1} parent=0 // pred_check_branch
    %25 = sbr.rel (0) target = $region17
  $region16: #{up_forward.1} parent=0 // pred_region
    _
  $region17: #{up_forward.1} parent=0 // pred_fallthru
    _
  // Predicated region
  $region18: #{up_forward.1} parent=0 // pred_check
    _
  $region19: #{up_forward.1} parent=0 // pred_check_branch
    %27 = sbr.rel (0) target = $region21
  $region20: #{up_forward.1} parent=0 // pred_region
    _
  $region21: #{up_forward.1} parent=0 // pred_fallthru
    _
  // Predicated region
  $region22: #{up_forward.1} parent=0 // pred_check
    _
  $region23: #{up_forward.1} parent=0 // pred_check_branch
    %29 = sbr.rel (0) target = $region25
  $region24: #{up_forward.1} parent=0 // pred_region
    _
  $region25: #{up_forward.1} parent=0 // pred_fallthru
    _
  // Predicated region
  $region26: #{up_forward.1} parent=0 // pred_check
    _
  $region27: #{up_forward.1} parent=0 // pred_check_branch
    %31 = sbr.rel (0) target = $region29
  $region28: #{up_forward.1} parent=0 // pred_region
    _
  $region29: #{up_forward.1} parent=0 // pred_fallthru
    _
  // Predicated region
  $region30: #{up_forward.1} parent=0 // pred_check
    _
  $region31: #{up_forward.1} parent=0 // pred_check_branch
    %33 = sbr.rel (0) target = $region33
  $region32: #{up_forward.1} parent=0 // pred_region
    _
  $region33: #{up_forward.1} parent=0 // pred_fallthru
    _
  // Predicated region
  $region34: #{up_forward.1} parent=0 // pred_check
    _
  $region35: #{up_forward.1} parent=0 // pred_check_branch
    %35 = sbr.rel (0) target = $region37
  $region36: #{up_forward.1} parent=0 // pred_region
    _
  $region37: #{up_forward.1} parent=0 // pred_fallthru
    _
  // Predicated region
  $region38: #{up_forward.1} parent=0 // pred_check
    _
  $region39: #{up_forward.1} parent=0 // pred_check_branch
    %37 = sbr.rel (0) target = $region41
  $region40: #{up_forward.1} parent=0 // pred_region
    _
  $region41: #{up_forward.1} parent=0 // pred_fallthru
    _
  // Predicated region
  $region42: #{up_forward.1} parent=0 // pred_check
    _
  $region43: #{up_forward.1} parent=0 // pred_check_branch
    %39 = sbr.rel (0) target = $region45
  $region44: #{up_forward.1} parent=0 // pred_region
    _
  $region45: #{up_forward.1} parent=0 // pred_fallthru
    _
  // Predicated region
  $region46: #{up_forward.1} parent=0 // pred_check
    _
  $region47: #{up_forward.1} parent=0 // pred_check_branch
    %41 = sbr.rel (0) target = $region49
  $region48: #{up_forward.1} parent=0 // pred_region
    _
  $region49: #{up_forward.1} parent=0 // pred_fallthru
    _
  // Predicated region
  $region50: #{up_forward.1} parent=0 // pred_check
    _
  $region51: #{up_forward.1} parent=0 // pred_check_branch
    %43 = sbr.rel (0) target = $region53
  $region52: #{up_forward.1} parent=0 // pred_region
    _
  $region53: #{up_forward.1} parent=0 // pred_fallthru
    _
  %v44 = vld [vmem:[%s0] sm:$0xff]
  %v45 = vld [vmem:[%s2] sm:$0xff]
  %v46 = vld [vmem:[%s2 + $0x8] sm:$0x1]
  %v47 = vld [vmem:[%s5] sm:$0xff]
  %48 = vrot.lane.b32.xlu0 %v44, 8
  %v49 = vpop.permute.xlu0 %48
  %51 = vset.pattern.permute.xlu0 0
  %52 = vperm.xlu0 %51, %v47
  %v53 = vpop.permute.xlu0 %52
  %v55 = vmul.f32 %v49, %v53
  %v56 = vlaneseq
  %v57 = vshrl.u32 %v56, 7
  %v58 = vsub.s32 0, %v57
  %v59 = vrot.slane %v45, %v58
  %v60 = vmul.f32 %v55, %v59
  %61 = vrot.lane.b32.xlu0 %v44, 7
  %v62 = vpop.permute.xlu0 %61
  %63 = vset.pattern.permute.xlu0 1
  %64 = vperm.xlu0 %63, %v47
  %v65 = vpop.permute.xlu0 %64
  %v67 = vmul.f32 %v62, %v65
  %v68 = vlaneseq
  %v69 = vshrl.u32 %v68, 7
  %v70 = vsub.s32 1, %v69
  %v71 = vrot.slane %v45, %v70
  %v72 = vmul.f32 %v67, %v71
  %v73 = vadd.f32 %v60, %v72
  %74 = vrot.lane.b32.xlu0 %v44, 6
  %v75 = vpop.permute.xlu0 %74
  %76 = vset.pattern.permute.xlu0 2
  %77 = vperm.xlu0 %76, %v47
  %v78 = vpop.permute.xlu0 %77
  %v80 = vmul.f32 %v75, %v78
  %v81 = vlaneseq
  %v82 = vshrl.u32 %v81, 7
  %v83 = vsub.s32 2, %v82
  %v84 = vrot.slane %v45, %v83
  %v85 = vmul.f32 %v80, %v84
  %v86 = vadd.f32 %v73, %v85
  %87 = vrot.lane.b32.xlu0 %v44, 1
  %v88 = vpop.permute.xlu0 %87
  %89 = vset.pattern.permute.xlu0 3
  %90 = vperm.xlu0 %89, %v47
  %v91 = vpop.permute.xlu0 %90
  %v93 = vmul.f32 %v88, %v91
  %v94 = vlaneseq
  %v95 = vshrl.u32 %v94, 7
  %v96 = vsub.s32 3, %v95
  %v97 = vrot.slane %v45, %v96
  %v98 = vmul.f32 %v93, %v97
  %v99 = vadd.f32 %v86, %v98
  %100 = vset.pattern.permute.xlu0 4
  %101 = vperm.xlu0 %100, %v47
  %v102 = vpop.permute.xlu0 %101
  %v104 = vmul.f32 %v44, %v102
  %v105 = vlaneseq
  %v106 = vshrl.u32 %v105, 7
  %v107 = vsub.s32 4, %v106
  %v108 = vrot.slane %v45, %v107
  %v109 = vmul.f32 %v104, %v108
  %v110 = vadd.f32 %v99, %v109
  %111 = vrot.lane.b32.xlu0 %v44, 127
  %v112 = vpop.permute.xlu0 %111
  %113 = vset.pattern.permute.xlu0 5
  %114 = vperm.xlu0 %113, %v47
  %v115 = vpop.permute.xlu0 %114
  %v117 = vmul.f32 %v112, %v115
  %v118 = vlaneseq
  %v119 = vshrl.u32 %v118, 7
  %v120 = vsub.s32 5, %v119
  %v121 = vrot.slane %v45, %v120
  %v122 = vmul.f32 %v117, %v121
  %v123 = vadd.f32 %v110, %v122
  %124 = vrot.lane.b32.xlu0 %v44, 122
  %v125 = vpop.permute.xlu0 %124
  %126 = vset.pattern.permute.xlu0 6
  %127 = vperm.xlu0 %126, %v47
  %v128 = vpop.permute.xlu0 %127
  %v130 = vmul.f32 %v125, %v128
  %v131 = vlaneseq
  %v132 = vshrl.u32 %v131, 7
  %v133 = vsub.s32 6, %v132
  %v134 = vrot.slane %v45, %v133
  %v135 = vmul.f32 %v130, %v134
  %v136 = vadd.f32 %v123, %v135
  %137 = vrot.lane.b32.xlu0 %v44, 121
  %v138 = vpop.permute.xlu0 %137
  %139 = vset.pattern.permute.xlu0 7
  %140 = vperm.xlu0 %139, %v47
  %v141 = vpop.permute.xlu0 %140
  %v143 = vmul.f32 %v138, %v141
  %v144 = vlaneseq
  %v145 = vshrl.u32 %v144, 7
  %v146 = vsub.s32 7, %v145
  %v147 = vrot.slane %v45, %v146
  %v148 = vmul.f32 %v143, %v147
  %v149 = vadd.f32 %v136, %v148
  %150 = vrot.lane.b32.xlu0 %v44, 120
  %v151 = vpop.permute.xlu0 %150
  %152 = vset.pattern.permute.xlu0 8
  %153 = vperm.xlu0 %152, %v47
  %v154 = vpop.permute.xlu0 %153
  %v156 = vmul.f32 %v151, %v154
  %v157 = vlaneseq
  %v158 = vshrl.u32 %v157, 7
  %v159 = vsub.s32 0, %v158
  %v160 = vrot.slane %v46, %v159
  %v161 = vmul.f32 %v156, %v160
  %v162 = vadd.f32 %v149, %v161
  %v163 = vld [vmem:[%s8] sm:$0xff]
  %vm164 = vcmask 64512
  %v166 = vsel %vm164, %v163, 0
  %168 = vmatprep.subr.mxu0 0.0
  %169 = vmatpush1.msra.mxu0 %v162
  %170 = vmatprep.subr.mxu0 0.0
  %171 = vmatpush1.msra.mxu0 0.0
  %172 = vmatprep.subr.mxu0 0.0
  %173 = vmatpush1.msra.mxu0 0.0
  %174 = vmatprep.subr.mxu0 0.0
  %175 = vmatpush1.msra.mxu0 0.0
  %176 = vmatprep.subr.mxu0 0.0
  %177 = vmatpush1.msra.mxu0 0.0
  %178 = vmatprep.subr.mxu0 0.0
  %179 = vmatpush1.msra.mxu0 0.0
  %180 = vmatprep.subr.mxu0 0.0
  %181 = vmatpush1.msra.mxu0 0.0
  %182 = vmatprep.subr.mxu0 0.0
  %183 = vmatpush1.msra.mxu0 0.0
  %184 = vmatprep.subr.mxu0 0.0
  %185 = vmatpush1.msra.mxu0 0.0
  %186 = vmatprep.subr.mxu0 0.0
  %187 = vmatpush1.msra.mxu0 0.0
  %188 = vmatprep.subr.mxu0 0.0
  %189 = vmatpush1.msra.mxu0 0.0
  %190 = vmatprep.subr.mxu0 0.0
  %191 = vmatpush1.msra.mxu0 0.0
  %192 = vmatprep.subr.mxu0 0.0
  %193 = vmatpush1.msra.mxu0 0.0
  %194 = vmatprep.subr.mxu0 0.0
  %195 = vmatpush1.msra.mxu0 0.0
  %196 = vmatprep.subr.mxu0 0.0
  %197 = vmatpush1.msra.mxu0 0.0
  %198 = vmatprep.subr.mxu0 0.0
  %199 = vmatpush1.msra.mxu0 0.0
  %200 = vmatprep.subr.mxu0 0.0
  %201 = vmatpush1.msra.mxu0 0.0
  %202 = vmatprep.subr.mxu0 0.0
  %203 = vmatpush1.msra.mxu0 0.0
  %204 = vmatprep.subr.mxu0 0.0
  %205 = vmatpush1.msra.mxu0 0.0
  %206 = vmatprep.subr.mxu0 0.0
  %207 = vmatpush1.msra.mxu0 0.0
  %208 = vmatprep.subr.mxu0 0.0
  %209 = vmatpush1.msra.mxu0 0.0
  %210 = vmatprep.subr.mxu0 0.0
  %211 = vmatpush1.msra.mxu0 0.0
  %212 = vmatprep.subr.mxu0 0.0
  %213 = vmatpush1.msra.mxu0 0.0
  %214 = vmatprep.subr.mxu0 0.0
  %215 = vmatpush1.msra.mxu0 0.0
  %216 = vmatprep.subr.mxu0 0.0
  %217 = vmatpush1.msra.mxu0 0.0
  %218 = vmatprep.subr.mxu0 0.0
  %219 = vmatpush1.msra.mxu0 0.0
  %220 = vmatprep.subr.mxu0 0.0
  %221 = vmatpush1.msra.mxu0 0.0
  %222 = vmatprep.subr.mxu0 0.0
  %223 = vmatpush1.msra.mxu0 0.0
  %224 = vmatprep.subr.mxu0 0.0
  %225 = vmatpush1.msra.mxu0 0.0
  %226 = vmatprep.subr.mxu0 0.0
  %227 = vmatpush1.msra.mxu0 0.0
  %228 = vmatprep.subr.mxu0 0.0
  %229 = vmatpush1.msra.mxu0 0.0
  %230 = vmatprep.subr.mxu0 0.0
  %231 = vmatpush1.msra.mxu0 0.0
  %232 = vmatprep.mubr.f32.mxu0 0.0
  %233 = vmatmul.mubr.f32.gmra.mrb[0].mxu0 %v166
  %v234 = vpop.f32.mrb[0].mxu0
  %v235 = vadd.f32 0.0, %v234
  %v236 = vpop.f32.mrb[0].mxu0
  %237 = vdwg.mxu0
  %v238 = vmax.f32 %v235, 0.0
  %v239 = vld [vmem:[%s6] sm:$0xff]
  %240 = vrot.lane.b32.xlu0 %v238, 8
  %v241 = vpop.permute.xlu0 %240
  %243 = vset.pattern.permute.xlu0 0
  %244 = vperm.xlu0 %243, %v239
  %v245 = vpop.permute.xlu0 %244
  %v247 = vmul.f32 %v241, %v245
  %v248 = vmul.f32 %v247, %v59
  %249 = vrot.lane.b32.xlu0 %v238, 7
  %v250 = vpop.permute.xlu0 %249
  %251 = vset.pattern.permute.xlu0 1
  %252 = vperm.xlu0 %251, %v239
  %v253 = vpop.permute.xlu0 %252
  %v255 = vmul.f32 %v250, %v253
  %v256 = vmul.f32 %v255, %v71
  %v257 = vadd.f32 %v248, %v256
  %258 = vrot.lane.b32.xlu0 %v238, 6
  %v259 = vpop.permute.xlu0 %258
  %260 = vset.pattern.permute.xlu0 2
  %261 = vperm.xlu0 %260, %v239
  %v262 = vpop.permute.xlu0 %261
  %v264 = vmul.f32 %v259, %v262
  %v265 = vmul.f32 %v264, %v84
  %v266 = vadd.f32 %v257, %v265
  %267 = vrot.lane.b32.xlu0 %v238, 1
  %v268 = vpop.permute.xlu0 %267
  %269 = vset.pattern.permute.xlu0 3
  %270 = vperm.xlu0 %269, %v239
  %v271 = vpop.permute.xlu0 %270
  %v273 = vmul.f32 %v268, %v271
  %v274 = vmul.f32 %v273, %v97
  %v275 = vadd.f32 %v266, %v274
  %276 = vset.pattern.permute.xlu0 4
  %277 = vperm.xlu0 %276, %v239
  %v278 = vpop.permute.xlu0 %277
  %v280 = vmul.f32 %v238, %v278
  %v281 = vmul.f32 %v280, %v108
  %v282 = vadd.f32 %v275, %v281
  %283 = vrot.lane.b32.xlu0 %v238, 127
  %v284 = vpop.permute.xlu0 %283
  %285 = vset.pattern.permute.xlu0 5
  %286 = vperm.xlu0 %285, %v239
  %v287 = vpop.permute.xlu0 %286
  %v289 = vmul.f32 %v284, %v287
  %v290 = vmul.f32 %v289, %v121
  %v291 = vadd.f32 %v282, %v290
  %292 = vrot.lane.b32.xlu0 %v238, 122
  %v293 = vpop.permute.xlu0 %292
  %294 = vset.pattern.permute.xlu0 6
  %295 = vperm.xlu0 %294, %v239
  %v296 = vpop.permute.xlu0 %295
  %v298 = vmul.f32 %v293, %v296
  %v299 = vmul.f32 %v298, %v134
  %v300 = vadd.f32 %v291, %v299
  %301 = vrot.lane.b32.xlu0 %v238, 121
  %v302 = vpop.permute.xlu0 %301
  %303 = vset.pattern.permute.xlu0 7
  %304 = vperm.xlu0 %303, %v239
  %v305 = vpop.permute.xlu0 %304
  %v307 = vmul.f32 %v302, %v305
  %v308 = vmul.f32 %v307, %v147
  %v309 = vadd.f32 %v300, %v308
  %310 = vrot.lane.b32.xlu0 %v238, 120
  %v311 = vpop.permute.xlu0 %310
  %312 = vset.pattern.permute.xlu0 8
  %313 = vperm.xlu0 %312, %v239
  %v314 = vpop.permute.xlu0 %313
  %v316 = vmul.f32 %v311, %v314
  %v317 = vmul.f32 %v316, %v160
  %v318 = vadd.f32 %v309, %v317
  %v319 = vld [vmem:[%s9] sm:$0xff]
  %v321 = vsel %vm164, %v319, 0
  %323 = vmatprep.subr.mxu0 0.0
  %324 = vmatpush1.msra.mxu0 %v318
  %325 = vmatprep.subr.mxu0 0.0
  %326 = vmatpush1.msra.mxu0 0.0
  %327 = vmatprep.subr.mxu0 0.0
  %328 = vmatpush1.msra.mxu0 0.0
  %329 = vmatprep.subr.mxu0 0.0
  %330 = vmatpush1.msra.mxu0 0.0
  %331 = vmatprep.subr.mxu0 0.0
  %332 = vmatpush1.msra.mxu0 0.0
  %333 = vmatprep.subr.mxu0 0.0
  %334 = vmatpush1.msra.mxu0 0.0
  %335 = vmatprep.subr.mxu0 0.0
  %336 = vmatpush1.msra.mxu0 0.0
  %337 = vmatprep.subr.mxu0 0.0
  %338 = vmatpush1.msra.mxu0 0.0
  %339 = vmatprep.subr.mxu0 0.0
  %340 = vmatpush1.msra.mxu0 0.0
  %341 = vmatprep.subr.mxu0 0.0
  %342 = vmatpush1.msra.mxu0 0.0
  %343 = vmatprep.subr.mxu0 0.0
  %344 = vmatpush1.msra.mxu0 0.0
  %345 = vmatprep.subr.mxu0 0.0
  %346 = vmatpush1.msra.mxu0 0.0
  %347 = vmatprep.subr.mxu0 0.0
  %348 = vmatpush1.msra.mxu0 0.0
  %349 = vmatprep.subr.mxu0 0.0
  %350 = vmatpush1.msra.mxu0 0.0
  %351 = vmatprep.subr.mxu0 0.0
  %352 = vmatpush1.msra.mxu0 0.0
  %353 = vmatprep.subr.mxu0 0.0
  %354 = vmatpush1.msra.mxu0 0.0
  %355 = vmatprep.subr.mxu0 0.0
  %356 = vmatpush1.msra.mxu0 0.0
  %357 = vmatprep.subr.mxu0 0.0
  %358 = vmatpush1.msra.mxu0 0.0
  %359 = vmatprep.subr.mxu0 0.0
  %360 = vmatpush1.msra.mxu0 0.0
  %361 = vmatprep.subr.mxu0 0.0
  %362 = vmatpush1.msra.mxu0 0.0
  %363 = vmatprep.subr.mxu0 0.0
  %364 = vmatpush1.msra.mxu0 0.0
  %365 = vmatprep.subr.mxu0 0.0
  %366 = vmatpush1.msra.mxu0 0.0
  %367 = vmatprep.subr.mxu0 0.0
  %368 = vmatpush1.msra.mxu0 0.0
  %369 = vmatprep.subr.mxu0 0.0
  %370 = vmatpush1.msra.mxu0 0.0
  %371 = vmatprep.subr.mxu0 0.0
  %372 = vmatpush1.msra.mxu0 0.0
  %373 = vmatprep.subr.mxu0 0.0
  %374 = vmatpush1.msra.mxu0 0.0
  %375 = vmatprep.subr.mxu0 0.0
  %376 = vmatpush1.msra.mxu0 0.0
  %377 = vmatprep.subr.mxu0 0.0
  %378 = vmatpush1.msra.mxu0 0.0
  %379 = vmatprep.subr.mxu0 0.0
  %380 = vmatpush1.msra.mxu0 0.0
  %381 = vmatprep.subr.mxu0 0.0
  %382 = vmatpush1.msra.mxu0 0.0
  %383 = vmatprep.subr.mxu0 0.0
  %384 = vmatpush1.msra.mxu0 0.0
  %385 = vmatprep.subr.mxu0 0.0
  %386 = vmatpush1.msra.mxu0 0.0
  %387 = vmatprep.mubr.f32.mxu0 0.0
  %388 = vmatmul.mubr.f32.gmra.mrb[0].mxu0 %v321
  %v389 = vpop.f32.mrb[0].mxu0
  %v390 = vadd.f32 0.0, %v389
  %v391 = vpop.f32.mrb[0].mxu0
  %392 = vdwg.mxu0
  %v393 = vadd.f32 %v44, %v390
  %v394 = vld [vmem:[%s11] sm:$0xff]
  %v395 = vld [vmem:[%s11 + $0x8] sm:$0xff]
  %v396 = vld [vmem:[%s11 + $0x10] sm:$0xff]
  %v397 = vld [vmem:[%s11 + $0x18] sm:$0xff]
  %v398 = vld [vmem:[%s12] sm:$0xff]
  %v399 = vld [vmem:[%s12 + $0x8] sm:$0xff]
  %v400 = vld [vmem:[%s12 + $0x10] sm:$0xff]
  %v401 = vld [vmem:[%s12 + $0x18] sm:$0xff]
  %403 = vset.pattern.permute.xlu0 0
  %404 = vperm.xlu0 %403, %v398
  %v405 = vpop.permute.xlu0 %404
  %408 = vset.pattern.permute.xlu0 0
  %409 = vperm.xlu0 %408, %v399
  %v410 = vpop.permute.xlu0 %409
  %413 = vset.pattern.permute.xlu0 0
  %414 = vperm.xlu0 %413, %v400
  %v415 = vpop.permute.xlu0 %414
  %418 = vset.pattern.permute.xlu0 0
  %419 = vperm.xlu0 %418, %v401
  %v420 = vpop.permute.xlu0 %419
  %v423 = vsel %vm164, %v394, 0
  %v426 = vsel %vm164, %v395, 0
  %v429 = vsel %vm164, %v396, 0
  %v432 = vsel %vm164, %v397, 0
  %434 = vmatprep.subr.mxu0 0.0
  %435 = vmatpush1.msra.mxu0 %v393
  %436 = vmatprep.subr.mxu0 0.0
  %437 = vmatpush1.msra.mxu0 0.0
  %438 = vmatprep.subr.mxu0 0.0
  %439 = vmatpush1.msra.mxu0 0.0
  %440 = vmatprep.subr.mxu0 0.0
  %441 = vmatpush1.msra.mxu0 0.0
  %442 = vmatprep.subr.mxu0 0.0
  %443 = vmatpush1.msra.mxu0 0.0
  %444 = vmatprep.subr.mxu0 0.0
  %445 = vmatpush1.msra.mxu0 0.0
  %446 = vmatprep.subr.mxu0 0.0
  %447 = vmatpush1.msra.mxu0 0.0
  %448 = vmatprep.subr.mxu0 0.0
  %449 = vmatpush1.msra.mxu0 0.0
  %450 = vmatprep.subr.mxu0 0.0
  %451 = vmatpush1.msra.mxu0 0.0
  %452 = vmatprep.subr.mxu0 0.0
  %453 = vmatpush1.msra.mxu0 0.0
  %454 = vmatprep.subr.mxu0 0.0
  %455 = vmatpush1.msra.mxu0 0.0
  %456 = vmatprep.subr.mxu0 0.0
  %457 = vmatpush1.msra.mxu0 0.0
  %458 = vmatprep.subr.mxu0 0.0
  %459 = vmatpush1.msra.mxu0 0.0
  %460 = vmatprep.subr.mxu0 0.0
  %461 = vmatpush1.msra.mxu0 0.0
  %462 = vmatprep.subr.mxu0 0.0
  %463 = vmatpush1.msra.mxu0 0.0
  %464 = vmatprep.subr.mxu0 0.0
  %465 = vmatpush1.msra.mxu0 0.0
  %466 = vmatprep.subr.mxu0 0.0
  %467 = vmatpush1.msra.mxu0 0.0
  %468 = vmatprep.subr.mxu0 0.0
  %469 = vmatpush1.msra.mxu0 0.0
  %470 = vmatprep.subr.mxu0 0.0
  %471 = vmatpush1.msra.mxu0 0.0
  %472 = vmatprep.subr.mxu0 0.0
  %473 = vmatpush1.msra.mxu0 0.0
  %474 = vmatprep.subr.mxu0 0.0
  %475 = vmatpush1.msra.mxu0 0.0
  %476 = vmatprep.subr.mxu0 0.0
  %477 = vmatpush1.msra.mxu0 0.0
  %478 = vmatprep.subr.mxu0 0.0
  %479 = vmatpush1.msra.mxu0 0.0
  %480 = vmatprep.subr.mxu0 0.0
  %481 = vmatpush1.msra.mxu0 0.0
  %482 = vmatprep.subr.mxu0 0.0
  %483 = vmatpush1.msra.mxu0 0.0
  %484 = vmatprep.subr.mxu0 0.0
  %485 = vmatpush1.msra.mxu0 0.0
  %486 = vmatprep.subr.mxu0 0.0
  %487 = vmatpush1.msra.mxu0 0.0
  %488 = vmatprep.subr.mxu0 0.0
  %489 = vmatpush1.msra.mxu0 0.0
  %490 = vmatprep.subr.mxu0 0.0
  %491 = vmatpush1.msra.mxu0 0.0
  %492 = vmatprep.subr.mxu0 0.0
  %493 = vmatpush1.msra.mxu0 0.0
  %494 = vmatprep.subr.mxu0 0.0
  %495 = vmatpush1.msra.mxu0 0.0
  %496 = vmatprep.subr.mxu0 0.0
  %497 = vmatpush1.msra.mxu0 0.0
  %498 = vmatprep.mubr.f32.mxu0 0.0
  %499 = vmatmul.mubr.f32.gmra.mrb[0].mxu0 %v423
  %v500 = vpop.f32.mrb[0].mxu0
  %v501 = vadd.f32 %v405, %v500
  %v502 = vpop.f32.mrb[0].mxu0
  %503 = vmatprep.mubr.f32.mxu0 0.0
  %504 = vmatmul.mubr.f32.gmra.mrb[0].mxu0 %v426
  %v505 = vpop.f32.mrb[0].mxu0
  %v506 = vadd.f32 %v410, %v505
  %v507 = vpop.f32.mrb[0].mxu0
  %508 = vmatprep.mubr.f32.mxu0 0.0
  %509 = vmatmul.mubr.f32.gmra.mrb[0].mxu0 %v429
  %v510 = vpop.f32.mrb[0].mxu0
  %v511 = vadd.f32 %v415, %v510
  %v512 = vpop.f32.mrb[0].mxu0
  %513 = vmatprep.mubr.f32.mxu0 0.0
  %514 = vmatmul.mubr.f32.gmra.mrb[0].mxu0 %v432
  %v515 = vpop.f32.mrb[0].mxu0
  %v516 = vadd.f32 %v420, %v515
  %v517 = vpop.f32.mrb[0].mxu0
  %518 = vdwg.mxu0
  %v519 = vld [vmem:[%s4] sm:$0xff]
  %v520 = vld [vmem:[%s4 + $0x8] sm:$0xff]
  %v521 = vld [vmem:[%s4 + $0x10] sm:$0xff]
  %v522 = vld [vmem:[%s4 + $0x18] sm:$0xff]
  %v523 = vld [vmem:[%s4 + $0x20] sm:$0xff]
  %v524 = vld [vmem:[%s4 + $0x28] sm:$0xff]
  %v525 = vld [vmem:[%s4 + $0x30] sm:$0xff]
  %v526 = vld [vmem:[%s4 + $0x38] sm:$0xff]
  %v527 = vld [vmem:[%s4 + $0x40] sm:$0xff]
  %v528 = vld [vmem:[%s4 + $0x48] sm:$0xff]
  %v529 = vld [vmem:[%s4 + $0x50] sm:$0xff]
  %v530 = vld [vmem:[%s4 + $0x58] sm:$0xff]
  %v531 = vld [vmem:[%s4 + $0x60] sm:$0xff]
  %v532 = vld [vmem:[%s4 + $0x68] sm:$0xff]
  %v533 = vld [vmem:[%s4 + $0x70] sm:$0xff]
  %v534 = vld [vmem:[%s4 + $0x78] sm:$0xff]
  %v535 = vld [vmem:[%s4 + $0x80] sm:$0xff]
  %v536 = vld [vmem:[%s4 + $0x88] sm:$0xff]
  %v537 = vld [vmem:[%s4 + $0x90] sm:$0xff]
  %v538 = vld [vmem:[%s4 + $0x98] sm:$0xff]
  %v539 = vld [vmem:[%s4 + $0xa0] sm:$0xff]
  %v540 = vld [vmem:[%s4 + $0xa8] sm:$0xff]
  %v541 = vld [vmem:[%s4 + $0xb0] sm:$0xff]
  %v542 = vld [vmem:[%s4 + $0xb8] sm:$0xff]
  %v543 = vld [vmem:[%s4 + $0xc0] sm:$0xff]
  %v544 = vld [vmem:[%s4 + $0xc8] sm:$0xff]
  %v545 = vld [vmem:[%s4 + $0xd0] sm:$0xff]
  %v546 = vld [vmem:[%s4 + $0xd8] sm:$0xff]
  %v547 = vld [vmem:[%s4 + $0xe0] sm:$0xff]
  %v548 = vld [vmem:[%s4 + $0xe8] sm:$0xff]
  %v549 = vld [vmem:[%s4 + $0xf0] sm:$0xff]
  %v550 = vld [vmem:[%s4 + $0xf8] sm:$0xff]
  %s551 = scalar_lea.vmem %s4, 256
  %v552 = vld [vmem:[%s551] sm:$0xff]
  %v553 = vld [vmem:[%s551 + $0x8] sm:$0xff]
  %v554 = vld [vmem:[%s551 + $0x10] sm:$0xff]
  %v555 = vld [vmem:[%s551 + $0x18] sm:$0xff]
  %v556 = vld [vmem:[%s551 + $0x20] sm:$0xff]
  %v557 = vld [vmem:[%s551 + $0x28] sm:$0xff]
  %v558 = vld [vmem:[%s551 + $0x30] sm:$0xff]
  %v559 = vld [vmem:[%s551 + $0x38] sm:$0xff]
  %v560 = vld [vmem:[%s551 + $0x40] sm:$0xff]
  %v561 = vld [vmem:[%s551 + $0x48] sm:$0xff]
  %v562 = vld [vmem:[%s551 + $0x50] sm:$0xff]
  %v563 = vld [vmem:[%s551 + $0x58] sm:$0xff]
  %v564 = vld [vmem:[%s551 + $0x60] sm:$0xff]
  %v565 = vld [vmem:[%s551 + $0x68] sm:$0xff]
  %v566 = vld [vmem:[%s551 + $0x70] sm:$0xff]
  %v567 = vld [vmem:[%s551 + $0x78] sm:$0xff]
  %v568 = vld [vmem:[%s551 + $0x80] sm:$0xff]
  %v569 = vld [vmem:[%s551 + $0x88] sm:$0xff]
  %v570 = vld [vmem:[%s551 + $0x90] sm:$0xff]
  %v571 = vld [vmem:[%s551 + $0x98] sm:$0xff]
  %v572 = vld [vmem:[%s551 + $0xa0] sm:$0xff]
  %v573 = vld [vmem:[%s551 + $0xa8] sm:$0xff]
  %v574 = vld [vmem:[%s551 + $0xb0] sm:$0xff]
  %v575 = vld [vmem:[%s551 + $0xb8] sm:$0xff]
  %v576 = vld [vmem:[%s551 + $0xc0] sm:$0xff]
  %v577 = vld [vmem:[%s551 + $0xc8] sm:$0xff]
  %v578 = vld [vmem:[%s551 + $0xd0] sm:$0xff]
  %v579 = vld [vmem:[%s551 + $0xd8] sm:$0xff]
  %v580 = vld [vmem:[%s551 + $0xe0] sm:$0xff]
  %v581 = vld [vmem:[%s551 + $0xe8] sm:$0xff]
  %v582 = vld [vmem:[%s551 + $0xf0] sm:$0xff]
  %v583 = vld [vmem:[%s551 + $0xf8] sm:$0xff]
  %584 = vmatprep.subr.mxu0 %v553
  %585 = vmatpush1.msra.mxu0 %v552
  %586 = vmatprep.subr.mxu0 %v555
  %587 = vmatpush1.msra.mxu0 %v554
  %588 = vmatprep.subr.mxu0 %v557
  %589 = vmatpush1.msra.mxu0 %v556
  %590 = vmatprep.subr.mxu0 %v559
  %591 = vmatpush1.msra.mxu0 %v558
  %592 = vmatprep.subr.mxu0 %v561
  %593 = vmatpush1.msra.mxu0 %v560
  %594 = vmatprep.subr.mxu0 %v563
  %595 = vmatpush1.msra.mxu0 %v562
  %596 = vmatprep.subr.mxu0 %v565
  %597 = vmatpush1.msra.mxu0 %v564
  %598 = vmatprep.subr.mxu0 %v567
  %599 = vmatpush1.msra.mxu0 %v566
  %600 = vmatprep.subr.mxu0 %v569
  %601 = vmatpush1.msra.mxu0 %v568
  %602 = vmatprep.subr.mxu0 %v571
  %603 = vmatpush1.msra.mxu0 %v570
  %604 = vmatprep.subr.mxu0 %v573
  %605 = vmatpush1.msra.mxu0 %v572
  %606 = vmatprep.subr.mxu0 %v575
  %607 = vmatpush1.msra.mxu0 %v574
  %608 = vmatprep.subr.mxu0 %v577
  %609 = vmatpush1.msra.mxu0 %v576
  %610 = vmatprep.subr.mxu0 %v579
  %611 = vmatpush1.msra.mxu0 %v578
  %612 = vmatprep.subr.mxu0 %v581
  %613 = vmatpush1.msra.mxu0 %v580
  %614 = vmatprep.subr.mxu0 %v583
  %615 = vmatpush1.msra.mxu0 %v582
  %616 = vmatprep.subr.mxu0 0.0
  %617 = vmatpush1.msra.mxu0 0.0
  %618 = vmatprep.subr.mxu0 0.0
  %619 = vmatpush1.msra.mxu0 0.0
  %620 = vmatprep.subr.mxu0 0.0
  %621 = vmatpush1.msra.mxu0 0.0
  %622 = vmatprep.subr.mxu0 0.0
  %623 = vmatpush1.msra.mxu0 0.0
  %624 = vmatprep.subr.mxu0 0.0
  %625 = vmatpush1.msra.mxu0 0.0
  %626 = vmatprep.subr.mxu0 0.0
  %627 = vmatpush1.msra.mxu0 0.0
  %628 = vmatprep.subr.mxu0 0.0
  %629 = vmatpush1.msra.mxu0 0.0
  %630 = vmatprep.subr.mxu0 0.0
  %631 = vmatpush1.msra.mxu0 0.0
  %632 = vmatprep.subr.mxu0 0.0
  %633 = vmatpush1.msra.mxu0 0.0
  %634 = vmatprep.subr.mxu0 0.0
  %635 = vmatpush1.msra.mxu0 0.0
  %636 = vmatprep.subr.mxu0 0.0
  %637 = vmatpush1.msra.mxu0 0.0
  %638 = vmatprep.subr.mxu0 0.0
  %639 = vmatpush1.msra.mxu0 0.0
  %640 = vmatprep.subr.mxu0 0.0
  %641 = vmatpush1.msra.mxu0 0.0
  %642 = vmatprep.subr.mxu0 0.0
  %643 = vmatpush1.msra.mxu0 0.0
  %644 = vmatprep.subr.mxu0 0.0
  %645 = vmatpush1.msra.mxu0 0.0
  %646 = vmatprep.subr.mxu0 0.0
  %647 = vmatpush1.msra.mxu0 0.0
  %648 = vmatprep.mubr.f32.mxu0 0.0
  %649 = vmatmul.mubr.f32.gmra.mrb[0].mxu0 %v506
  %v650 = vpop.f32.mrb[0].mxu0
  %v651 = vadd.f32 0.0, %v650
  %v652 = vpop.f32.mrb[0].mxu0
  %v653 = vadd.f32 0.0, %v652
  %654 = vdwg.mxu0
  %655 = vmatprep.subr.mxu0 %v520
  %656 = vmatpush1.msra.mxu0 %v519
  %657 = vmatprep.subr.mxu0 %v522
  %658 = vmatpush1.msra.mxu0 %v521
  %659 = vmatprep.subr.mxu0 %v524
  %660 = vmatpush1.msra.mxu0 %v523
  %661 = vmatprep.subr.mxu0 %v526
  %662 = vmatpush1.msra.mxu0 %v525
  %663 = vmatprep.subr.mxu0 %v528
  %664 = vmatpush1.msra.mxu0 %v527
  %665 = vmatprep.subr.mxu0 %v530
  %666 = vmatpush1.msra.mxu0 %v529
  %667 = vmatprep.subr.mxu0 %v532
  %668 = vmatpush1.msra.mxu0 %v531
  %669 = vmatprep.subr.mxu0 %v534
  %670 = vmatpush1.msra.mxu0 %v533
  %671 = vmatprep.subr.mxu0 %v536
  %672 = vmatpush1.msra.mxu0 %v535
  %673 = vmatprep.subr.mxu0 %v538
  %674 = vmatpush1.msra.mxu0 %v537
  %675 = vmatprep.subr.mxu0 %v540
  %676 = vmatpush1.msra.mxu0 %v539
  %677 = vmatprep.subr.mxu0 %v542
  %678 = vmatpush1.msra.mxu0 %v541
  %679 = vmatprep.subr.mxu0 %v544
  %680 = vmatpush1.msra.mxu0 %v543
  %681 = vmatprep.subr.mxu0 %v546
  %682 = vmatpush1.msra.mxu0 %v545
  %683 = vmatprep.subr.mxu0 %v548
  %684 = vmatpush1.msra.mxu0 %v547
  %685 = vmatprep.subr.mxu0 %v550
  %686 = vmatpush1.msra.mxu0 %v549
  %687 = vmatprep.subr.mxu0 0.0
  %688 = vmatpush1.msra.mxu0 0.0
  %689 = vmatprep.subr.mxu0 0.0
  %690 = vmatpush1.msra.mxu0 0.0
  %691 = vmatprep.subr.mxu0 0.0
  %692 = vmatpush1.msra.mxu0 0.0
  %693 = vmatprep.subr.mxu0 0.0
  %694 = vmatpush1.msra.mxu0 0.0
  %695 = vmatprep.subr.mxu0 0.0
  %696 = vmatpush1.msra.mxu0 0.0
  %697 = vmatprep.subr.mxu0 0.0
  %698 = vmatpush1.msra.mxu0 0.0
  %699 = vmatprep.subr.mxu0 0.0
  %700 = vmatpush1.msra.mxu0 0.0
  %701 = vmatprep.subr.mxu0 0.0
  %702 = vmatpush1.msra.mxu0 0.0
  %703 = vmatprep.subr.mxu0 0.0
  %704 = vmatpush1.msra.mxu0 0.0
  %705 = vmatprep.subr.mxu0 0.0
  %706 = vmatpush1.msra.mxu0 0.0
  %707 = vmatprep.subr.mxu0 0.0
  %708 = vmatpush1.msra.mxu0 0.0
  %709 = vmatprep.subr.mxu0 0.0
  %710 = vmatpush1.msra.mxu0 0.0
  %711 = vmatprep.subr.mxu0 0.0
  %712 = vmatpush1.msra.mxu0 0.0
  %713 = vmatprep.subr.mxu0 0.0
  %714 = vmatpush1.msra.mxu0 0.0
  %715 = vmatprep.subr.mxu0 0.0
  %716 = vmatpush1.msra.mxu0 0.0
  %717 = vmatprep.subr.mxu0 0.0
  %718 = vmatpush1.msra.mxu0 0.0
  %719 = vmatprep.mubr.f32.mxu0 0.0
  %720 = vmatmul.mubr.f32.gmra.mrb[0].mxu0 %v501
  %v721 = vpop.f32.mrb[0].mxu0
  %v722 = vadd.f32 %v651, %v721
  %v723 = vpop.f32.mrb[0].mxu0
  %v724 = vadd.f32 %v653, %v723
  %725 = vdwg.mxu0
  %s726 = scalar_lea.vmem %s4, 512
  %v727 = vld [vmem:[%s726] sm:$0xff]
  %v728 = vld [vmem:[%s726 + $0x8] sm:$0xff]
  %v729 = vld [vmem:[%s726 + $0x10] sm:$0xff]
  %v730 = vld [vmem:[%s726 + $0x18] sm:$0xff]
  %v731 = vld [vmem:[%s726 + $0x20] sm:$0xff]
  %v732 = vld [vmem:[%s726 + $0x28] sm:$0xff]
  %v733 = vld [vmem:[%s726 + $0x30] sm:$0xff]
  %v734 = vld [vmem:[%s726 + $0x38] sm:$0xff]
  %v735 = vld [vmem:[%s726 + $0x40] sm:$0xff]
  %v736 = vld [vmem:[%s726 + $0x48] sm:$0xff]
  %v737 = vld [vmem:[%s726 + $0x50] sm:$0xff]
  %v738 = vld [vmem:[%s726 + $0x58] sm:$0xff]
  %v739 = vld [vmem:[%s726 + $0x60] sm:$0xff]
  %v740 = vld [vmem:[%s726 + $0x68] sm:$0xff]
  %v741 = vld [vmem:[%s726 + $0x70] sm:$0xff]
  %v742 = vld [vmem:[%s726 + $0x78] sm:$0xff]
  %v743 = vld [vmem:[%s726 + $0x80] sm:$0xff]
  %v744 = vld [vmem:[%s726 + $0x88] sm:$0xff]
  %v745 = vld [vmem:[%s726 + $0x90] sm:$0xff]
  %v746 = vld [vmem:[%s726 + $0x98] sm:$0xff]
  %v747 = vld [vmem:[%s726 + $0xa0] sm:$0xff]
  %v748 = vld [vmem:[%s726 + $0xa8] sm:$0xff]
  %v749 = vld [vmem:[%s726 + $0xb0] sm:$0xff]
  %v750 = vld [vmem:[%s726 + $0xb8] sm:$0xff]
  %v751 = vld [vmem:[%s726 + $0xc0] sm:$0xff]
  %v752 = vld [vmem:[%s726 + $0xc8] sm:$0xff]
  %v753 = vld [vmem:[%s726 + $0xd0] sm:$0xff]
  %v754 = vld [vmem:[%s726 + $0xd8] sm:$0xff]
  %v755 = vld [vmem:[%s726 + $0xe0] sm:$0xff]
  %v756 = vld [vmem:[%s726 + $0xe8] sm:$0xff]
  %v757 = vld [vmem:[%s726 + $0xf0] sm:$0xff]
  %v758 = vld [vmem:[%s726 + $0xf8] sm:$0xff]
  %759 = vmatprep.subr.mxu0 %v728
  %760 = vmatpush1.msra.mxu0 %v727
  %761 = vmatprep.subr.mxu0 %v730
  %762 = vmatpush1.msra.mxu0 %v729
  %763 = vmatprep.subr.mxu0 %v732
  %764 = vmatpush1.msra.mxu0 %v731
  %765 = vmatprep.subr.mxu0 %v734
  %766 = vmatpush1.msra.mxu0 %v733
  %767 = vmatprep.subr.mxu0 %v736
  %768 = vmatpush1.msra.mxu0 %v735
  %769 = vmatprep.subr.mxu0 %v738
  %770 = vmatpush1.msra.mxu0 %v737
  %771 = vmatprep.subr.mxu0 %v740
  %772 = vmatpush1.msra.mxu0 %v739
  %773 = vmatprep.subr.mxu0 %v742
  %774 = vmatpush1.msra.mxu0 %v741
  %775 = vmatprep.subr.mxu0 %v744
  %776 = vmatpush1.msra.mxu0 %v743
  %777 = vmatprep.subr.mxu0 %v746
  %778 = vmatpush1.msra.mxu0 %v745
  %779 = vmatprep.subr.mxu0 %v748
  %780 = vmatpush1.msra.mxu0 %v747
  %781 = vmatprep.subr.mxu0 %v750
  %782 = vmatpush1.msra.mxu0 %v749
  %783 = vmatprep.subr.mxu0 %v752
  %784 = vmatpush1.msra.mxu0 %v751
  %785 = vmatprep.subr.mxu0 %v754
  %786 = vmatpush1.msra.mxu0 %v753
  %787 = vmatprep.subr.mxu0 %v756
  %788 = vmatpush1.msra.mxu0 %v755
  %789 = vmatprep.subr.mxu0 %v758
  %790 = vmatpush1.msra.mxu0 %v757
  %791 = vmatprep.subr.mxu0 0.0
  %792 = vmatpush1.msra.mxu0 0.0
  %793 = vmatprep.subr.mxu0 0.0
  %794 = vmatpush1.msra.mxu0 0.0
  %795 = vmatprep.subr.mxu0 0.0
  %796 = vmatpush1.msra.mxu0 0.0
  %797 = vmatprep.subr.mxu0 0.0
  %798 = vmatpush1.msra.mxu0 0.0
  %799 = vmatprep.subr.mxu0 0.0
  %800 = vmatpush1.msra.mxu0 0.0
  %801 = vmatprep.subr.mxu0 0.0
  %802 = vmatpush1.msra.mxu0 0.0
  %803 = vmatprep.subr.mxu0 0.0
  %804 = vmatpush1.msra.mxu0 0.0
  %805 = vmatprep.subr.mxu0 0.0
  %806 = vmatpush1.msra.mxu0 0.0
  %807 = vmatprep.subr.mxu0 0.0
  %808 = vmatpush1.msra.mxu0 0.0
  %809 = vmatprep.subr.mxu0 0.0
  %810 = vmatpush1.msra.mxu0 0.0
  %811 = vmatprep.subr.mxu0 0.0
  %812 = vmatpush1.msra.mxu0 0.0
  %813 = vmatprep.subr.mxu0 0.0
  %814 = vmatpush1.msra.mxu0 0.0
  %815 = vmatprep.subr.mxu0 0.0
  %816 = vmatpush1.msra.mxu0 0.0
  %817 = vmatprep.subr.mxu0 0.0
  %818 = vmatpush1.msra.mxu0 0.0
  %819 = vmatprep.subr.mxu0 0.0
  %820 = vmatpush1.msra.mxu0 0.0
  %821 = vmatprep.subr.mxu0 0.0
  %822 = vmatpush1.msra.mxu0 0.0
  %823 = vmatprep.mubr.f32.mxu0 0.0
  %824 = vmatmul.mubr.f32.gmra.mrb[0].mxu0 %v511
  %v825 = vpop.f32.mrb[0].mxu0
  %v826 = vadd.f32 0.0, %v825
  %v827 = vpop.f32.mrb[0].mxu0
  %v828 = vadd.f32 0.0, %v827
  %829 = vdwg.mxu0
  %v830 = vadd.f32 %v722, %v826
  %v831 = vadd.f32 %v724, %v828
  %s832 = scalar_lea.vmem %s4, 768
  %v833 = vld [vmem:[%s832] sm:$0xff]
  %v834 = vld [vmem:[%s832 + $0x8] sm:$0xff]
  %v835 = vld [vmem:[%s832 + $0x10] sm:$0xff]
  %v836 = vld [vmem:[%s832 + $0x18] sm:$0xff]
  %v837 = vld [vmem:[%s832 + $0x20] sm:$0xff]
  %v838 = vld [vmem:[%s832 + $0x28] sm:$0xff]
  %v839 = vld [vmem:[%s832 + $0x30] sm:$0xff]
  %v840 = vld [vmem:[%s832 + $0x38] sm:$0xff]
  %v841 = vld [vmem:[%s832 + $0x40] sm:$0xff]
  %v842 = vld [vmem:[%s832 + $0x48] sm:$0xff]
  %v843 = vld [vmem:[%s832 + $0x50] sm:$0xff]
  %v844 = vld [vmem:[%s832 + $0x58] sm:$0xff]
  %v845 = vld [vmem:[%s832 + $0x60] sm:$0xff]
  %v846 = vld [vmem:[%s832 + $0x68] sm:$0xff]
  %v847 = vld [vmem:[%s832 + $0x70] sm:$0xff]
  %v848 = vld [vmem:[%s832 + $0x78] sm:$0xff]
  %v849 = vld [vmem:[%s832 + $0x80] sm:$0xff]
  %v850 = vld [vmem:[%s832 + $0x88] sm:$0xff]
  %v851 = vld [vmem:[%s832 + $0x90] sm:$0xff]
  %v852 = vld [vmem:[%s832 + $0x98] sm:$0xff]
  %v853 = vld [vmem:[%s832 + $0xa0] sm:$0xff]
  %v854 = vld [vmem:[%s832 + $0xa8] sm:$0xff]
  %v855 = vld [vmem:[%s832 + $0xb0] sm:$0xff]
  %v856 = vld [vmem:[%s832 + $0xb8] sm:$0xff]
  %v857 = vld [vmem:[%s832 + $0xc0] sm:$0xff]
  %v858 = vld [vmem:[%s832 + $0xc8] sm:$0xff]
  %v859 = vld [vmem:[%s832 + $0xd0] sm:$0xff]
  %v860 = vld [vmem:[%s832 + $0xd8] sm:$0xff]
  %v861 = vld [vmem:[%s832 + $0xe0] sm:$0xff]
  %v862 = vld [vmem:[%s832 + $0xe8] sm:$0xff]
  %v863 = vld [vmem:[%s832 + $0xf0] sm:$0xff]
  %v864 = vld [vmem:[%s832 + $0xf8] sm:$0xff]
  %865 = vmatprep.subr.mxu0 %v834
  %866 = vmatpush1.msra.mxu0 %v833
  %867 = vmatprep.subr.mxu0 %v836
  %868 = vmatpush1.msra.mxu0 %v835
  %869 = vmatprep.subr.mxu0 %v838
  %870 = vmatpush1.msra.mxu0 %v837
  %871 = vmatprep.subr.mxu0 %v840
  %872 = vmatpush1.msra.mxu0 %v839
  %873 = vmatprep.subr.mxu0 %v842
  %874 = vmatpush1.msra.mxu0 %v841
  %875 = vmatprep.subr.mxu0 %v844
  %876 = vmatpush1.msra.mxu0 %v843
  %877 = vmatprep.subr.mxu0 %v846
  %878 = vmatpush1.msra.mxu0 %v845
  %879 = vmatprep.subr.mxu0 %v848
  %880 = vmatpush1.msra.mxu0 %v847
  %881 = vmatprep.subr.mxu0 %v850
  %882 = vmatpush1.msra.mxu0 %v849
  %883 = vmatprep.subr.mxu0 %v852
  %884 = vmatpush1.msra.mxu0 %v851
  %885 = vmatprep.subr.mxu0 %v854
  %886 = vmatpush1.msra.mxu0 %v853
  %887 = vmatprep.subr.mxu0 %v856
  %888 = vmatpush1.msra.mxu0 %v855
  %889 = vmatprep.subr.mxu0 %v858
  %890 = vmatpush1.msra.mxu0 %v857
  %891 = vmatprep.subr.mxu0 %v860
  %892 = vmatpush1.msra.mxu0 %v859
  %893 = vmatprep.subr.mxu0 %v862
  %894 = vmatpush1.msra.mxu0 %v861
  %895 = vmatprep.subr.mxu0 %v864
  %896 = vmatpush1.msra.mxu0 %v863
  %897 = vmatprep.subr.mxu0 0.0
  %898 = vmatpush1.msra.mxu0 0.0
  %899 = vmatprep.subr.mxu0 0.0
  %900 = vmatpush1.msra.mxu0 0.0
  %901 = vmatprep.subr.mxu0 0.0
  %902 = vmatpush1.msra.mxu0 0.0
  %903 = vmatprep.subr.mxu0 0.0
  %904 = vmatpush1.msra.mxu0 0.0
  %905 = vmatprep.subr.mxu0 0.0
  %906 = vmatpush1.msra.mxu0 0.0
  %907 = vmatprep.subr.mxu0 0.0
  %908 = vmatpush1.msra.mxu0 0.0
  %909 = vmatprep.subr.mxu0 0.0
  %910 = vmatpush1.msra.mxu0 0.0
  %911 = vmatprep.subr.mxu0 0.0
  %912 = vmatpush1.msra.mxu0 0.0
  %913 = vmatprep.subr.mxu0 0.0
  %914 = vmatpush1.msra.mxu0 0.0
  %915 = vmatprep.subr.mxu0 0.0
  %916 = vmatpush1.msra.mxu0 0.0
  %917 = vmatprep.subr.mxu0 0.0
  %918 = vmatpush1.msra.mxu0 0.0
  %919 = vmatprep.subr.mxu0 0.0
  %920 = vmatpush1.msra.mxu0 0.0
  %921 = vmatprep.subr.mxu0 0.0
  %922 = vmatpush1.msra.mxu0 0.0
  %923 = vmatprep.subr.mxu0 0.0
  %924 = vmatpush1.msra.mxu0 0.0
  %925 = vmatprep.subr.mxu0 0.0
  %926 = vmatpush1.msra.mxu0 0.0
  %927 = vmatprep.subr.mxu0 0.0
  %928 = vmatpush1.msra.mxu0 0.0
  %929 = vmatprep.mubr.f32.mxu0 0.0
  %930 = vmatmul.mubr.f32.gmra.mrb[0].mxu0 %v516
  %v931 = vpop.f32.mrb[0].mxu0
  %v932 = vadd.f32 0.0, %v931
  %v933 = vpop.f32.mrb[0].mxu0
  %v934 = vadd.f32 0.0, %v933
  %935 = vdwg.mxu0
  %v936 = vadd.f32 %v830, %v932
  %v937 = vadd.f32 %v831, %v934
  %v938 = vld [vmem:[%s1] sm:$0xff]
  %v939 = vld [vmem:[%s1 + $0x8] sm:$0xff]
  %v940 = vld [vmem:[%s1 + $0x10] sm:$0xff]
  %v941 = vld [vmem:[%s1 + $0x18] sm:$0xff]
  %v942 = vld [vmem:[%s7] sm:$0xff]
  %v943 = vld [vmem:[%s7 + $0x8] sm:$0xff]
  %v944 = vld [vmem:[%s3] sm:$0xff]
  %v945 = vld [vmem:[%s3 + $0x8] sm:$0xff]
  %v946 = vld [vmem:[%s3 + $0x10] sm:$0x1]
  %v947 = vld [vmem:[%s3 + $0x18] sm:$0x1]
  %948 = vrot.lane.b32.xlu0 %v938, 17
  %v949 = vpop.permute.xlu0 %948
  %950 = vrot.lane.b32.xlu0 %v940, 17
  %v951 = vpop.permute.xlu0 %950
  %952 = vrot.lane.b32.xlu0 %v939, 17
  %v953 = vpop.permute.xlu0 %952
  %954 = vrot.lane.b32.xlu0 %v941, 17
  %v955 = vpop.permute.xlu0 %954
  %v956 = vlaneseq
  %v957 = vand.u32 %v956, 127
  %vm958 = vcmp.lt.s32.totalorder %v957, 17
  %v959 = vsel %vm958, %v949, %v953
  %v960 = vsel %vm958, %v951, %v955
  %v961 = vsel %vm958, %v953, %v949
  %v962 = vsel %vm958, %v955, %v951
  %964 = vset.pattern.permute.xlu0 0
  %965 = vperm.xlu0 %964, %v942
  %v966 = vpop.permute.xlu0 %965
  %969 = vset.pattern.permute.xlu0 0
  %970 = vperm.xlu0 %969, %v943
  %v971 = vpop.permute.xlu0 %970
  %v973 = vmul.f32 %v961, %v966
  %v974 = vmul.f32 %v959, %v966
  %v975 = vmul.f32 %v962, %v971
  %v976 = vmul.f32 %v960, %v971
  %v977 = vlaneseq
  %v978 = vshrl.u32 %v977, 7
  %v979 = vsub.s32 0, %v978
  %v980 = vrot.slane %v944, %v979
  %v981 = vlaneseq
  %v982 = vshrl.u32 %v981, 7
  %v983 = vsub.s32 0, %v982
  %v984 = vrot.slane %v945, %v983
  %v985 = vmul.f32 %v973, %v980
  %v986 = vmul.f32 %v974, %v984
  %v987 = vmul.f32 %v975, %v980
  %v988 = vmul.f32 %v976, %v984
  %989 = vrot.lane.b32.xlu0 %v938, 16
  %v990 = vpop.permute.xlu0 %989
  %991 = vrot.lane.b32.xlu0 %v940, 16
  %v992 = vpop.permute.xlu0 %991
  %993 = vrot.lane.b32.xlu0 %v939, 16
  %v994 = vpop.permute.xlu0 %993
  %995 = vrot.lane.b32.xlu0 %v941, 16
  %v996 = vpop.permute.xlu0 %995
  %vm997 = vcmp.lt.s32.totalorder %v957, 16
  %v998 = vsel %vm997, %v990, %v994
  %v999 = vsel %vm997, %v992, %v996
  %v1000 = vsel %vm997, %v994, %v990
  %v1001 = vsel %vm997, %v996, %v992
  %1002 = vset.pattern.permute.xlu0 1
  %1003 = vperm.xlu0 %1002, %v942
  %v1004 = vpop.permute.xlu0 %1003
  %1006 = vset.pattern.permute.xlu0 1
  %1007 = vperm.xlu0 %1006, %v943
  %v1008 = vpop.permute.xlu0 %1007
  %v1010 = vmul.f32 %v1000, %v1004
  %v1011 = vmul.f32 %v998, %v1004
  %v1012 = vmul.f32 %v1001, %v1008
  %v1013 = vmul.f32 %v999, %v1008
  %v1014 = vlaneseq
  %v1015 = vshrl.u32 %v1014, 7
  %v1016 = vsub.s32 1, %v1015
  %v1017 = vrot.slane %v944, %v1016
  %v1018 = vlaneseq
  %v1019 = vshrl.u32 %v1018, 7
  %v1020 = vsub.s32 1, %v1019
  %v1021 = vrot.slane %v945, %v1020
  %v1022 = vmul.f32 %v1010, %v1017
  %v1023 = vmul.f32 %v1011, %v1021
  %v1024 = vmul.f32 %v1012, %v1017
  %v1025 = vmul.f32 %v1013, %v1021
  %v1026 = vadd.f32 %v985, %v1022
  %v1027 = vadd.f32 %v986, %v1023
  %v1028 = vadd.f32 %v987, %v1024
  %v1029 = vadd.f32 %v988, %v1025
  %1030 = vrot.lane.b32.xlu0 %v938, 15
  %v1031 = vpop.permute.xlu0 %1030
  %1032 = vrot.lane.b32.xlu0 %v940, 15
  %v1033 = vpop.permute.xlu0 %1032
  %1034 = vrot.lane.b32.xlu0 %v939, 15
  %v1035 = vpop.permute.xlu0 %1034
  %1036 = vrot.lane.b32.xlu0 %v941, 15
  %v1037 = vpop.permute.xlu0 %1036
  %vm1038 = vcmp.lt.s32.totalorder %v957, 15
  %v1039 = vsel %vm1038, %v1031, %v1035
  %v1040 = vsel %vm1038, %v1033, %v1037
  %v1041 = vsel %vm1038, %v1035, %v1031
  %v1042 = vsel %vm1038, %v1037, %v1033
  %1043 = vset.pattern.permute.xlu0 2
  %1044 = vperm.xlu0 %1043, %v942
  %v1045 = vpop.permute.xlu0 %1044
  %1047 = vset.pattern.permute.xlu0 2
  %1048 = vperm.xlu0 %1047, %v943
  %v1049 = vpop.permute.xlu0 %1048
  %v1051 = vmul.f32 %v1041, %v1045
  %v1052 = vmul.f32 %v1039, %v1045
  %v1053 = vmul.f32 %v1042, %v1049
  %v1054 = vmul.f32 %v1040, %v1049
  %v1055 = vlaneseq
  %v1056 = vshrl.u32 %v1055, 7
  %v1057 = vsub.s32 2, %v1056
  %v1058 = vrot.slane %v944, %v1057
  %v1059 = vlaneseq
  %v1060 = vshrl.u32 %v1059, 7
  %v1061 = vsub.s32 2, %v1060
  %v1062 = vrot.slane %v945, %v1061
  %v1063 = vmul.f32 %v1051, %v1058
  %v1064 = vmul.f32 %v1052, %v1062
  %v1065 = vmul.f32 %v1053, %v1058
  %v1066 = vmul.f32 %v1054, %v1062
  %v1067 = vadd.f32 %v1026, %v1063
  %v1068 = vadd.f32 %v1027, %v1064
  %v1069 = vadd.f32 %v1028, %v1065
  %v1070 = vadd.f32 %v1029, %v1066
  %1071 = vrot.lane.b32.xlu0 %v938, 1
  %v1072 = vpop.permute.xlu0 %1071
  %1073 = vrot.lane.b32.xlu0 %v940, 1
  %v1074 = vpop.permute.xlu0 %1073
  %1075 = vrot.lane.b32.xlu0 %v939, 1
  %v1076 = vpop.permute.xlu0 %1075
  %1077 = vrot.lane.b32.xlu0 %v941, 1
  %v1078 = vpop.permute.xlu0 %1077
  %vm1079 = vcmp.lt.s32.totalorder %v957, 1
  %v1080 = vsel %vm1079, %v1072, %v1076
  %v1081 = vsel %vm1079, %v1074, %v1078
  %v1082 = vsel %vm1079, %v1076, %v1072
  %v1083 = vsel %vm1079, %v1078, %v1074
  %1084 = vset.pattern.permute.xlu0 3
  %1085 = vperm.xlu0 %1084, %v942
  %v1086 = vpop.permute.xlu0 %1085
  %1088 = vset.pattern.permute.xlu0 3
  %1089 = vperm.xlu0 %1088, %v943
  %v1090 = vpop.permute.xlu0 %1089
  %v1092 = vmul.f32 %v1082, %v1086
  %v1093 = vmul.f32 %v1080, %v1086
  %v1094 = vmul.f32 %v1083, %v1090
  %v1095 = vmul.f32 %v1081, %v1090
  %v1096 = vlaneseq
  %v1097 = vshrl.u32 %v1096, 7
  %v1098 = vsub.s32 3, %v1097
  %v1099 = vrot.slane %v944, %v1098
  %v1100 = vlaneseq
  %v1101 = vshrl.u32 %v1100, 7
  %v1102 = vsub.s32 3, %v1101
  %v1103 = vrot.slane %v945, %v1102
  %v1104 = vmul.f32 %v1092, %v1099
  %v1105 = vmul.f32 %v1093, %v1103
  %v1106 = vmul.f32 %v1094, %v1099
  %v1107 = vmul.f32 %v1095, %v1103
  %v1108 = vadd.f32 %v1067, %v1104
  %v1109 = vadd.f32 %v1068, %v1105
  %v1110 = vadd.f32 %v1069, %v1106
  %v1111 = vadd.f32 %v1070, %v1107
  %1112 = vset.pattern.permute.xlu0 4
  %1113 = vperm.xlu0 %1112, %v942
  %v1114 = vpop.permute.xlu0 %1113
  %1116 = vset.pattern.permute.xlu0 4
  %1117 = vperm.xlu0 %1116, %v943
  %v1118 = vpop.permute.xlu0 %1117
  %v1120 = vmul.f32 %v938, %v1114
  %v1121 = vmul.f32 %v939, %v1114
  %v1122 = vmul.f32 %v940, %v1118
  %v1123 = vmul.f32 %v941, %v1118
  %v1124 = vlaneseq
  %v1125 = vshrl.u32 %v1124, 7
  %v1126 = vsub.s32 4, %v1125
  %v1127 = vrot.slane %v944, %v1126
  %v1128 = vlaneseq
  %v1129 = vshrl.u32 %v1128, 7
  %v1130 = vsub.s32 4, %v1129
  %v1131 = vrot.slane %v945, %v1130
  %v1132 = vmul.f32 %v1120, %v1127
  %v1133 = vmul.f32 %v1121, %v1131
  %v1134 = vmul.f32 %v1122, %v1127
  %v1135 = vmul.f32 %v1123, %v1131
  %v1136 = vadd.f32 %v1108, %v1132
  %v1137 = vadd.f32 %v1109, %v1133
  %v1138 = vadd.f32 %v1110, %v1134
  %v1139 = vadd.f32 %v1111, %v1135
  %1140 = vrot.lane.b32.xlu0 %v938, 127
  %v1141 = vpop.permute.xlu0 %1140
  %1142 = vrot.lane.b32.xlu0 %v940, 127
  %v1143 = vpop.permute.xlu0 %1142
  %1144 = vrot.lane.b32.xlu0 %v939, 127
  %v1145 = vpop.permute.xlu0 %1144
  %1146 = vrot.lane.b32.xlu0 %v941, 127
  %v1147 = vpop.permute.xlu0 %1146
  %vm1148 = vcmp.lt.s32.totalorder %v957, 127
  %v1149 = vsel %vm1148, %v1141, %v1145
  %v1150 = vsel %vm1148, %v1143, %v1147
  %v1151 = vsel %vm1148, %v1145, %v1141
  %v1152 = vsel %vm1148, %v1147, %v1143
  %1153 = vset.pattern.permute.xlu0 5
  %1154 = vperm.xlu0 %1153, %v942
  %v1155 = vpop.permute.xlu0 %1154
  %1157 = vset.pattern.permute.xlu0 5
  %1158 = vperm.xlu0 %1157, %v943
  %v1159 = vpop.permute.xlu0 %1158
  %v1161 = vmul.f32 %v1149, %v1155
  %v1162 = vmul.f32 %v1151, %v1155
  %v1163 = vmul.f32 %v1150, %v1159
  %v1164 = vmul.f32 %v1152, %v1159
  %v1165 = vlaneseq
  %v1166 = vshrl.u32 %v1165, 7
  %v1167 = vsub.s32 5, %v1166
  %v1168 = vrot.slane %v944, %v1167
  %v1169 = vlaneseq
  %v1170 = vshrl.u32 %v1169, 7
  %v1171 = vsub.s32 5, %v1170
  %v1172 = vrot.slane %v945, %v1171
  %v1173 = vmul.f32 %v1161, %v1168
  %v1174 = vmul.f32 %v1162, %v1172
  %v1175 = vmul.f32 %v1163, %v1168
  %v1176 = vmul.f32 %v1164, %v1172
  %v1177 = vadd.f32 %v1136, %v1173
  %v1178 = vadd.f32 %v1137, %v1174
  %v1179 = vadd.f32 %v1138, %v1175
  %v1180 = vadd.f32 %v1139, %v1176
  %1181 = vrot.lane.b32.xlu0 %v938, 113
  %v1182 = vpop.permute.xlu0 %1181
  %1183 = vrot.lane.b32.xlu0 %v940, 113
  %v1184 = vpop.permute.xlu0 %1183
  %1185 = vrot.lane.b32.xlu0 %v939, 113
  %v1186 = vpop.permute.xlu0 %1185
  %1187 = vrot.lane.b32.xlu0 %v941, 113
  %v1188 = vpop.permute.xlu0 %1187
  %vm1189 = vcmp.lt.s32.totalorder %v957, 113
  %v1190 = vsel %vm1189, %v1182, %v1186
  %v1191 = vsel %vm1189, %v1184, %v1188
  %v1192 = vsel %vm1189, %v1186, %v1182
  %v1193 = vsel %vm1189, %v1188, %v1184
  %1194 = vset.pattern.permute.xlu0 6
  %1195 = vperm.xlu0 %1194, %v942
  %v1196 = vpop.permute.xlu0 %1195
  %1198 = vset.pattern.permute.xlu0 6
  %1199 = vperm.xlu0 %1198, %v943
  %v1200 = vpop.permute.xlu0 %1199
  %v1202 = vmul.f32 %v1190, %v1196
  %v1203 = vmul.f32 %v1192, %v1196
  %v1204 = vmul.f32 %v1191, %v1200
  %v1205 = vmul.f32 %v1193, %v1200
  %v1206 = vlaneseq
  %v1207 = vshrl.u32 %v1206, 7
  %v1208 = vsub.s32 6, %v1207
  %v1209 = vrot.slane %v944, %v1208
  %v1210 = vlaneseq
  %v1211 = vshrl.u32 %v1210, 7
  %v1212 = vsub.s32 6, %v1211
  %v1213 = vrot.slane %v945, %v1212
  %v1214 = vmul.f32 %v1202, %v1209
  %v1215 = vmul.f32 %v1203, %v1213
  %v1216 = vmul.f32 %v1204, %v1209
  %v1217 = vmul.f32 %v1205, %v1213
  %v1218 = vadd.f32 %v1177, %v1214
  %v1219 = vadd.f32 %v1178, %v1215
  %v1220 = vadd.f32 %v1179, %v1216
  %v1221 = vadd.f32 %v1180, %v1217
  %1222 = vrot.lane.b32.xlu0 %v938, 112
  %v1223 = vpop.permute.xlu0 %1222
  %1224 = vrot.lane.b32.xlu0 %v940, 112
  %v1225 = vpop.permute.xlu0 %1224
  %1226 = vrot.lane.b32.xlu0 %v939, 112
  %v1227 = vpop.permute.xlu0 %1226
  %1228 = vrot.lane.b32.xlu0 %v941, 112
  %v1229 = vpop.permute.xlu0 %1228
  %vm1230 = vcmp.lt.s32.totalorder %v957, 112
  %v1231 = vsel %vm1230, %v1223, %v1227
  %v1232 = vsel %vm1230, %v1225, %v1229
  %v1233 = vsel %vm1230, %v1227, %v1223
  %v1234 = vsel %vm1230, %v1229, %v1225
  %1235 = vset.pattern.permute.xlu0 7
  %1236 = vperm.xlu0 %1235, %v942
  %v1237 = vpop.permute.xlu0 %1236
  %1239 = vset.pattern.permute.xlu0 7
  %1240 = vperm.xlu0 %1239, %v943
  %v1241 = vpop.permute.xlu0 %1240
  %v1243 = vmul.f32 %v1231, %v1237
  %v1244 = vmul.f32 %v1233, %v1237
  %v1245 = vmul.f32 %v1232, %v1241
  %v1246 = vmul.f32 %v1234, %v1241
  %v1247 = vlaneseq
  %v1248 = vshrl.u32 %v1247, 7
  %v1249 = vsub.s32 7, %v1248
  %v1250 = vrot.slane %v944, %v1249
  %v1251 = vlaneseq
  %v1252 = vshrl.u32 %v1251, 7
  %v1253 = vsub.s32 7, %v1252
  %v1254 = vrot.slane %v945, %v1253
  %v1255 = vmul.f32 %v1243, %v1250
  %v1256 = vmul.f32 %v1244, %v1254
  %v1257 = vmul.f32 %v1245, %v1250
  %v1258 = vmul.f32 %v1246, %v1254
  %v1259 = vadd.f32 %v1218, %v1255
  %v1260 = vadd.f32 %v1219, %v1256
  %v1261 = vadd.f32 %v1220, %v1257
  %v1262 = vadd.f32 %v1221, %v1258
  %1263 = vrot.lane.b32.xlu0 %v938, 111
  %v1264 = vpop.permute.xlu0 %1263
  %1265 = vrot.lane.b32.xlu0 %v940, 111
  %v1266 = vpop.permute.xlu0 %1265
  %1267 = vrot.lane.b32.xlu0 %v939, 111
  %v1268 = vpop.permute.xlu0 %1267
  %1269 = vrot.lane.b32.xlu0 %v941, 111
  %v1270 = vpop.permute.xlu0 %1269
  %vm1271 = vcmp.lt.s32.totalorder %v957, 111
  %v1272 = vsel %vm1271, %v1264, %v1268
  %v1273 = vsel %vm1271, %v1266, %v1270
  %v1274 = vsel %vm1271, %v1268, %v1264
  %v1275 = vsel %vm1271, %v1270, %v1266
  %1276 = vset.pattern.permute.xlu0 8
  %1277 = vperm.xlu0 %1276, %v942
  %v1278 = vpop.permute.xlu0 %1277
  %1280 = vset.pattern.permute.xlu0 8
  %1281 = vperm.xlu0 %1280, %v943
  %v1282 = vpop.permute.xlu0 %1281
  %v1284 = vmul.f32 %v1272, %v1278
  %v1285 = vmul.f32 %v1274, %v1278
  %v1286 = vmul.f32 %v1273, %v1282
  %v1287 = vmul.f32 %v1275, %v1282
  %v1288 = vlaneseq
  %v1289 = vshrl.u32 %v1288, 7
  %v1290 = vsub.s32 0, %v1289
  %v1291 = vrot.slane %v946, %v1290
  %v1292 = vlaneseq
  %v1293 = vshrl.u32 %v1292, 7
  %v1294 = vsub.s32 0, %v1293
  %v1295 = vrot.slane %v947, %v1294
  %v1296 = vmul.f32 %v1284, %v1291
  %v1297 = vmul.f32 %v1285, %v1295
  %v1298 = vmul.f32 %v1286, %v1291
  %v1299 = vmul.f32 %v1287, %v1295
  %v1300 = vadd.f32 %v1259, %v1296
  %v1301 = vadd.f32 %v1260, %v1297
  %v1302 = vadd.f32 %v1261, %v1298
  %v1303 = vadd.f32 %v1262, %v1299
  %v1304 = vld [vmem:[%s10] sm:$0xff]
  %vm1305 = vcmask 130048
  %v1307 = vsel %vm1305, %v1304, 0
  %1309 = vmatprep.subr.mxu0 %v1301
  %1310 = vmatpush1.msra.mxu0 %v1300
  %1311 = vmatprep.subr.mxu0 %v1303
  %1312 = vmatpush1.msra.mxu0 %v1302
  %1313 = vmatprep.subr.mxu0 0.0
  %1314 = vmatpush1.msra.mxu0 0.0
  %1315 = vmatprep.subr.mxu0 0.0
  %1316 = vmatpush1.msra.mxu0 0.0
  %1317 = vmatprep.subr.mxu0 0.0
  %1318 = vmatpush1.msra.mxu0 0.0
  %1319 = vmatprep.subr.mxu0 0.0
  %1320 = vmatpush1.msra.mxu0 0.0
  %1321 = vmatprep.subr.mxu0 0.0
  %1322 = vmatpush1.msra.mxu0 0.0
  %1323 = vmatprep.subr.mxu0 0.0
  %1324 = vmatpush1.msra.mxu0 0.0
  %1325 = vmatprep.subr.mxu0 0.0
  %1326 = vmatpush1.msra.mxu0 0.0
  %1327 = vmatprep.subr.mxu0 0.0
  %1328 = vmatpush1.msra.mxu0 0.0
  %1329 = vmatprep.subr.mxu0 0.0
  %1330 = vmatpush1.msra.mxu0 0.0
  %1331 = vmatprep.subr.mxu0 0.0
  %1332 = vmatpush1.msra.mxu0 0.0
  %1333 = vmatprep.subr.mxu0 0.0
  %1334 = vmatpush1.msra.mxu0 0.0
  %1335 = vmatprep.subr.mxu0 0.0
  %1336 = vmatpush1.msra.mxu0 0.0
  %1337 = vmatprep.subr.mxu0 0.0
  %1338 = vmatpush1.msra.mxu0 0.0
  %1339 = vmatprep.subr.mxu0 0.0
  %1340 = vmatpush1.msra.mxu0 0.0
  %1341 = vmatprep.subr.mxu0 0.0
  %1342 = vmatpush1.msra.mxu0 0.0
  %1343 = vmatprep.subr.mxu0 0.0
  %1344 = vmatpush1.msra.mxu0 0.0
  %1345 = vmatprep.subr.mxu0 0.0
  %1346 = vmatpush1.msra.mxu0 0.0
  %1347 = vmatprep.subr.mxu0 0.0
  %1348 = vmatpush1.msra.mxu0 0.0
  %1349 = vmatprep.subr.mxu0 0.0
  %1350 = vmatpush1.msra.mxu0 0.0
  %1351 = vmatprep.subr.mxu0 0.0
  %1352 = vmatpush1.msra.mxu0 0.0
  %1353 = vmatprep.subr.mxu0 0.0
  %1354 = vmatpush1.msra.mxu0 0.0
  %1355 = vmatprep.subr.mxu0 0.0
  %1356 = vmatpush1.msra.mxu0 0.0
  %1357 = vmatprep.subr.mxu0 0.0
  %1358 = vmatpush1.msra.mxu0 0.0
  %1359 = vmatprep.subr.mxu0 0.0
  %1360 = vmatpush1.msra.mxu0 0.0
  %1361 = vmatprep.subr.mxu0 0.0
  %1362 = vmatpush1.msra.mxu0 0.0
  %1363 = vmatprep.subr.mxu0 0.0
  %1364 = vmatpush1.msra.mxu0 0.0
  %1365 = vmatprep.subr.mxu0 0.0
  %1366 = vmatpush1.msra.mxu0 0.0
  %1367 = vmatprep.subr.mxu0 0.0
  %1368 = vmatpush1.msra.mxu0 0.0
  %1369 = vmatprep.subr.mxu0 0.0
  %1370 = vmatpush1.msra.mxu0 0.0
  %1371 = vmatprep.subr.mxu0 0.0
  %1372 = vmatpush1.msra.mxu0 0.0
  %1373 = vmatprep.mubr.f32.mxu0 0.0
  %1374 = vmatmul.mubr.f32.gmra.mrb[0].mxu0 %v1307
  %v1375 = vpop.f32.mrb[0].mxu0
  %v1376 = vadd.f32 0.0, %v1375
  %v1377 = vpop.f32.mrb[0].mxu0
  %v1378 = vadd.f32 0.0, %v1377
  %1379 = vdwg.mxu0
  %v1380 = vadd.f32 %v936, %v1376
  %v1381 = vadd.f32 %v937, %v1378
  %1382 = vst [vmem:[%s13] sm:$0xff] %v1380
  %1383 = vst [vmem:[%s13 + $0x8] sm:$0xff] %v1381
  // Predicated region
  $region54: #{up_forward.1} parent=0 // pred_check
    _
  $region55: #{up_forward.1} parent=0 // pred_check_branch
    %1385 = sbr.rel (0) target = $region57
  $region56: #{up_forward.1} parent=0 // pred_region
    _
  $region57: #{up_forward.1} parent=0 // pred_fallthru
    _
  // Predicated region
  $region58: #{up_forward.1} parent=0 // pred_check
    _
  $region59: #{up_forward.1} parent=0 // pred_check_branch
    %1387 = sbr.rel (0) target = $region61
  $region60: #{up_forward.1} parent=0 // pred_region
    _
  $region61: #{up_forward.1} parent=0 // pred_fallthru
    _

</llo_original>
